<compile_context>
chip_gen: v7x
topology: tpu7x:2x2x1
jax: 0.10.0
libtpu: 0.0.40
codegen_flags: <defaults>
</compile_context>

<pallas_src>
import jax
import jax.numpy as jnp
import numpy as np
from jax import lax
from jax.experimental import pallas as pl
from jax.experimental.pallas import tpu as pltpu


def sadm_fused_kernel(x_ref, w_ref, b_ref, o_ref):
    # x_ref: (1, C, HW)  native NCHW-flattened layout (HW lane-dense)
    # w_ref: (Co, C)     1x1-conv weight
    # b_ref: (1, Co)     bias
    # o_ref: (1, K, R, Co//2) pooled output; flat order == torch (Co, H//2, W//2)
    _, k_groups, r, _half = o_ref.shape
    co = w_ref.shape[0]
    x = x_ref[0]                                                     # (C, HW)

    # score[p, q] = sum_c x[c, p] * x[c, q]  == bmm(q^T, k)
    score = lax.dot_general(x, x, (((0,), (0,)), ((), ())),
                            preferred_element_type=jnp.float32)      # (HW, HW)

    # Unnormalized, numerically-stable softmax; normalization folded into y below.
    m = jnp.max(score, axis=-1, keepdims=True)                       # (HW, 1)
    e = jnp.exp(score - m)                                           # (HW, HW)
    s = jnp.sum(e, axis=-1, keepdims=True)                           # (HW, 1)

    # 1x1 conv as per-pixel matmul: v[p, o] = sum_c x[c, p] * w[o, c] + b[o]
    v = lax.dot_general(x, w_ref[...], (((0,), (1,)), ((), ())),
                        preferred_element_type=jnp.float32)          # (HW, Co)
    v = v + b_ref[...]

    y = jnp.dot(e, v, preferred_element_type=jnp.float32)            # (HW, Co)
    y = y * pl.reciprocal(s, approx=False)                           # normalize rows

    # Fused 2x2 max-pool over the raw (HW*Co,) -> (Co, H, W) reinterpretation.
    # Horizontal window neighbours are adjacent column pairs of y (Co even).
    pairs = [jnp.maximum(y[:, 2 * t:2 * t + 1], y[:, 2 * t + 1:2 * t + 2])
             for t in range(co // 2)]
    z = pairs[0] if co == 2 else jnp.concatenate(pairs, axis=1)      # (HW, Co//2)

    # Vertical window neighbours: within every group of 2R consecutive rows of z,
    # the first R rows are an even image row and the next R the odd image row of
    # the same reinterpreted channel.  Max them pairwise; row-major flat order of
    # the (K, R, Co//2) result is exactly the pooled (Co, H//2, W//2) flat order.
    z3 = z.reshape(k_groups, 2 * r, co // 2)                         # (K, 2R, Co//2)
    pooled = jnp.maximum(z3[:, :r, :], z3[:, r:, :])                 # (K, R, Co//2)
    o_ref[0] = pooled.astype(o_ref.dtype)


def sadm_a_forward(x, weight, bias):
    """x: (B, C, H, W) f32; weight: (Co, C, 1, 1); bias: (Co,)."""
    b, c, h, w = x.shape
    co = weight.shape[0]
    hw = h * w
    assert h % 2 == 0 and w % 2 == 0, "2x2 max-pool needs even spatial dims"
    assert co % 2 == 0 and w % co == 0, "fused pool layout assumes Co even and Co | W"
    r = w // co                 # y-rows per reinterpreted image row
    k_groups = (co * h) // 2    # number of 2-image-row pooling groups

    # Free layout prep (no transposes): native (B, C, HW), (Co, C) weight, (1, Co) bias.
    xq = x.reshape(b, c, hw).astype(jnp.float32)
    wt = weight.reshape(co, c).astype(jnp.float32)
    bias2 = bias.reshape(1, co).astype(jnp.float32)

    pooled = pl.pallas_call(
        sadm_fused_kernel,
        out_shape=jax.ShapeDtypeStruct((b, k_groups, r, co // 2), jnp.float32),
        grid=(b,),
        in_specs=[
            pl.BlockSpec((1, c, hw), lambda i: (i, 0, 0)),
            pl.BlockSpec((co, c), lambda i: (0, 0)),
            pl.BlockSpec((1, co), lambda i: (0, 0)),
        ],
        out_specs=pl.BlockSpec((1, k_groups, r, co // 2), lambda i: (i, 0, 0, 0)),
        compiler_params=pltpu.CompilerParams(dimension_semantics=("parallel",)),
    )(xq, wt, bias2)

    # Free raw reinterpretation back to (B, Co, H//2, W//2).
    return pooled.reshape(b, co, h // 2, w // 2)


def sadm_a_reference(x, weight, bias):
    """Pure-JAX reference mirroring the PyTorch forward exactly."""
    b, c, h, w = x.shape
    co = weight.shape[0]
    q = x.reshape(b, c, h * w)
    score = jnp.einsum("bcp,bcq->bpq", q, q)
    attn = jax.nn.softmax(score, axis=-1)
    v = jnp.einsum("oc,bcp->bop", weight.reshape(co, c), q) + bias[None, :, None]
    v = jnp.transpose(v, (0, 2, 1))                         # (b, hw, co)
    y = jnp.einsum("bpq,bqo->bpo", attn, v)                 # (b, hw, co)
    yr = y.reshape(b, co, h, w)                             # raw reinterpretation
    return lax.reduce_window(yr, -jnp.inf, lax.max,
                             (1, 1, 2, 2), (1, 1, 2, 2), "VALID")


if __name__ == "__main__":
    key = jax.random.PRNGKey(0)
    k1, k2, k3 = jax.random.split(key, 3)
    b, c_in, c_out, h, w = 2, 4, 4, 16, 16

    x = jax.random.normal(k1, (b, c_in, h, w), dtype=jnp.float32)
    # deterministic synthetic Conv2d(c_in, c_out, 1) parameters
    weight = 0.5 * jax.random.normal(k2, (c_out, c_in, 1, 1), dtype=jnp.float32)
    bias = 0.1 * jax.random.normal(k3, (c_out,), dtype=jnp.float32)

    out = jax.block_until_ready(sadm_a_forward(x, weight, bias))
    ref = jax.block_until_ready(sadm_a_reference(x, weight, bias))
    np.testing.assert_allclose(np.asarray(out), np.asarray(ref), rtol=1e-4, atol=1e-4)
    print("KERNEL_OK")
</pallas_src>

<mosaic_0001>
module attributes {stable_mosaic.version = 11 : i64} {
  func.func @sadm_fused_kernel(%arg0: i32, %arg1: memref<1x4x256xf32, #tpu.memory_space<vmem>>, %arg2: memref<4x4xf32, #tpu.memory_space<vmem>>, %arg3: memref<1x4xf32, #tpu.memory_space<vmem>>, %arg4: memref<1x32x4x2xf32, #tpu.memory_space<vmem>>) attributes {dimension_semantics = [#tpu.dimension_semantics<parallel>], iteration_bounds = array<i64: 2>, scalar_prefetch = 0 : i64, scratch_operands = 0 : i64, tpu.core_type = #tpu.core_type<tc>, window_params = [{transform_indices = @transform_0, window_bounds = array<i64: 1, 4, 256>}, {pipeline_mode = #tpu.pipeline_mode<synchronous>, transform_indices = @transform_1, window_bounds = array<i64: 4, 4>}, {pipeline_mode = #tpu.pipeline_mode<synchronous>, transform_indices = @transform_2, window_bounds = array<i64: 1, 4>}, {transform_indices = @transform_3, window_bounds = array<i64: 1, 32, 4, 2>}]} {
    %c0 = arith.constant 0 : index
    %c0_0 = arith.constant 0 : index
    %c0_1 = arith.constant 0 : index
    %0 = vector.load %arg1[%c0, %c0_0, %c0_1] : memref<1x4x256xf32, #tpu.memory_space<vmem>>, vector<1x4x256xf32>
    %1 = vector.shape_cast %0 : vector<1x4x256xf32> to vector<4x256xf32>
    %cst = arith.constant dense<0.000000e+00> : vector<256x256xf32>
    %2 = tpu.matmul %1, %1, %cst {dimension_numbers = #tpu.dot_dimension_numbers<[0], [0], [1], [1], [0, 1, 1, 1], [], []>} : vector<4x256xf32>, vector<4x256xf32>, vector<256x256xf32> -> vector<256x256xf32>
    %cst_2 = arith.constant dense<0xFF800000> : vector<256xf32>
    %3 = vector.multi_reduction <maximumf>, %2, %cst_2 [1] : vector<256x256xf32> to vector<256xf32>
    %4 = vector.shape_cast %3 : vector<256xf32> to vector<256x1xf32>
    %5 = vector.broadcast %4 : vector<256x1xf32> to vector<256x256xf32>
    %6 = arith.subf %2, %5 : vector<256x256xf32>
    %7 = math.exp %6 : vector<256x256xf32>
    %cst_3 = arith.constant dense<0.000000e+00> : vector<256xf32>
    %8 = vector.multi_reduction <add>, %7, %cst_3 [1] : vector<256x256xf32> to vector<256xf32>
    %9 = vector.shape_cast %8 : vector<256xf32> to vector<256x1xf32>
    %c0_4 = arith.constant 0 : index
    %c0_5 = arith.constant 0 : index
    %10 = vector.load %arg2[%c0_4, %c0_5] : memref<4x4xf32, #tpu.memory_space<vmem>>, vector<4x4xf32>
    %cst_6 = arith.constant dense<0.000000e+00> : vector<256x4xf32>
    %11 = tpu.matmul %1, %10, %cst_6 {dimension_numbers = #tpu.dot_dimension_numbers<[0], [1], [1], [0], [0, 1, 1, 0], [], []>} : vector<4x256xf32>, vector<4x4xf32>, vector<256x4xf32> -> vector<256x4xf32>
    %c0_7 = arith.constant 0 : index
    %c0_8 = arith.constant 0 : index
    %12 = vector.load %arg3[%c0_7, %c0_8] : memref<1x4xf32, #tpu.memory_space<vmem>>, vector<1x4xf32>
    %13 = vector.broadcast %12 : vector<1x4xf32> to vector<256x4xf32>
    %14 = arith.addf %11, %13 : vector<256x4xf32>
    %cst_9 = arith.constant dense<0.000000e+00> : vector<256x4xf32>
    %15 = tpu.matmul %7, %14, %cst_9 {dimension_numbers = #tpu.dot_dimension_numbers<[1], [0], [0], [1], [0, 0, 1, 1], [], []>} : vector<256x256xf32>, vector<256x4xf32>, vector<256x4xf32> -> vector<256x4xf32>
    %16 = tpu.reciprocal %9 : vector<256x1xf32> -> vector<256x1xf32>
    %17 = vector.broadcast %16 : vector<256x1xf32> to vector<256x4xf32>
    %18 = arith.mulf %15, %17 : vector<256x4xf32>
    %19 = vector.extract_strided_slice %18 {offsets = [0, 0], sizes = [256, 1], strides = [1, 1]} : vector<256x4xf32> to vector<256x1xf32>
    %20 = vector.extract_strided_slice %18 {offsets = [0, 1], sizes = [256, 1], strides = [1, 1]} : vector<256x4xf32> to vector<256x1xf32>
    %21 = arith.maximumf %19, %20 : vector<256x1xf32>
    %22 = vector.extract_strided_slice %18 {offsets = [0, 2], sizes = [256, 1], strides = [1, 1]} : vector<256x4xf32> to vector<256x1xf32>
    %23 = vector.extract_strided_slice %18 {offsets = [0, 3], sizes = [256, 1], strides = [1, 1]} : vector<256x4xf32> to vector<256x1xf32>
    %24 = arith.maximumf %22, %23 : vector<256x1xf32>
    %25 = tpu.concatenate %21, %24 in 1 : vector<256x1xf32>, vector<256x1xf32> -> vector<256x2xf32>
    %26 = vector.shape_cast %25 : vector<256x2xf32> to vector<32x8x2xf32>
    %27 = vector.extract_strided_slice %26 {offsets = [0, 0, 0], sizes = [32, 4, 2], strides = [1, 1, 1]} : vector<32x8x2xf32> to vector<32x4x2xf32>
    %28 = vector.extract_strided_slice %26 {offsets = [0, 4, 0], sizes = [32, 4, 2], strides = [1, 1, 1]} : vector<32x8x2xf32> to vector<32x4x2xf32>
    %29 = arith.maximumf %27, %28 : vector<32x4x2xf32>
    %c0_10 = arith.constant 0 : index
    %c0_11 = arith.constant 0 : index
    %c0_12 = arith.constant 0 : index
    %c0_13 = arith.constant 0 : index
    %30 = vector.load %arg4[%c0_10, %c0_11, %c0_12, %c0_13] : memref<1x32x4x2xf32, #tpu.memory_space<vmem>>, vector<1x32x4x2xf32>
    %31 = vector.shape_cast %30 : vector<1x32x4x2xf32> to vector<32x4x2xf32>
    %32 = vector.shape_cast %29 : vector<32x4x2xf32> to vector<1x32x4x2xf32>
    tpu.vector_store %arg4[%c0_10, %c0_11, %c0_12, %c0_13], %32 {strides = array<i32>} : memref<1x32x4x2xf32, #tpu.memory_space<vmem>>, vector<1x32x4x2xf32>,
    return
  }
  func.func @transform_0(%arg0: i32) -> (i32, i32, i32) {
    %c0_i32 = arith.constant 0 : i32
    %c0_i32_0 = arith.constant 0 : i32
    %c0_i32_1 = arith.constant 0 : i32
    return %arg0, %c0_i32, %c0_i32_0 : i32, i32, i32
  }
  func.func @transform_1(%arg0: i32) -> (i32, i32) {
    %c0_i32 = arith.constant 0 : i32
    %c0_i32_0 = arith.constant 0 : i32
    %c0_i32_1 = arith.constant 0 : i32
    return %c0_i32, %c0_i32_0 : i32, i32
  }
  func.func @transform_2(%arg0: i32) -> (i32, i32) {
    %c0_i32 = arith.constant 0 : i32
    %c0_i32_0 = arith.constant 0 : i32
    %c0_i32_1 = arith.constant 0 : i32
    return %c0_i32, %c0_i32_0 : i32, i32
  }
  func.func @transform_3(%arg0: i32) -> (i32, i32, i32, i32) {
    %c0_i32 = arith.constant 0 : i32
    %c0_i32_0 = arith.constant 0 : i32
    %c0_i32_1 = arith.constant 0 : i32
    %c0_i32_2 = arith.constant 0 : i32
    return %arg0, %c0_i32, %c0_i32_0, %c0_i32_1 : i32, i32, i32, i32
  }
}

</mosaic_0001>

<llo_original>
// kernel: tpu_custom_call.1
$region0: #{tpu_custom_call.1}
  #allocation0 [shape = 'u32[]', space=smem, size = 0x4, offset = 0x4, fixed_abs, tag = 'smem constant byte address 0x4 - core index']
  #allocation1 [shape = 'u32[144,128]{1,0:T(1,128)}', space=vmem, size = 0x12000, scoped, tag = 'internal scratch']
  %s0 = inlined_call_operand.hbm [shape: f32[2,4,256], index: 0, kind: input, shape index: {}]
  %s1 = inlined_call_operand.hbm [shape: f32[4,4], index: 1, kind: input, shape index: {}]
  %s2 = inlined_call_operand.vmem [shape: f32[1,4], index: 2, kind: input, shape index: {}]
  %s3 = inlined_call_operand.vmem [shape: f32[2,32,4,2], index: 3, kind: output, shape index: {}]
  %s4 = sld [smem:[#allocation0]]
  $region53: #{tpu_custom_call.1} parent=0
    _
  %s6 = ssub.s32 1, %s4
  %s7 = scalar_select 0, %s6, %s4
  $region1: #{tpu_custom_call.1} parent=0
    #allocation2 [shape = 'u8[8192]{0}', space=vmem, size = 0x2000, scoped, tag = 'input window, operand 0']
    #allocation3 [shape = 's32[2]{0}', space=sflag, size = 0x8, scoped, tag = 'scoped memory for tpu_custom_call.1']
    #allocation4 [shape = 'u8[2048]{0}', space=vmem, size = 0x800, scoped, tag = 'input window, operand 1, single buffered']
    #allocation5 [shape = 's32[1]{0}', space=sflag, size = 0x4, scoped, tag = 'scoped memory for tpu_custom_call.1']
    %8 = vsyncpa [#allocation3], 0
    %s9 = scalar_lea.sflag [#allocation3], 1
    %10 = vsyncpa %s9, 0
    %11 = vsyncpa [#allocation5], 0
    loop: start=0, step=1, limit=4
    $region2: #{tpu_custom_call.1} parent=1 // loop_pre_header
      _
    $region3: #{tpu_custom_call.1} parent=1 // loop_header
      %s13 = sphi 0, %s17
      %p14 = scmp.ge.s32.totalorder %s13, 4
      %s23 = sphi 0, %s25
      %s26 = sphi 0, %s23
      %s27 = sphi 0, %s26
      %s43 = sphi 0, %s27
      %s47 = sphi 0, %s47
      %s49 = sphi 0, %s47
      %s50 = sphi 0, %s49
      %s64 = sphi 0, %s50
      %s68 = sphi 0, %s68
      %s70 = sphi 0, %s68
      %s71 = sphi 0, %s70
      %s85 = sphi 0, %s71
      %s91 = sphi 0, %s93
      %s94 = sphi 0, %s91
      %s95 = sphi 0, %s94
      %s111 = sphi 0, %s95
    $region4: #{tpu_custom_call.1} parent=1 // loop_header_branch
      %16 = sbr.rel (%p14) target = $region8
    $region5: #{tpu_custom_call.1} parent=1 // loop_body
      %s18 = ssub.s32 %s13, 1
      %s19 = ssub.s32 %s13, 2
      %s20 = sadd.s32 %s13, 1
      %s21 = ssub.s32 %s13, %s20
      %p22 = scmp.eq.s32.totalorder %s21, 0
      %s24 = sadd.s32 %s23, 1
      %s25 = scalar_select %p22, %s23, %s24
      %p28 = pneg %p22
      %p29 = scmp.eq.s32.totalorder %s13, 1
      %p30 = por %p28, %p29
      %p31 = scmp.ne.s32.totalorder %s23, %s26
      %p32 = scmp.eq.s32.totalorder %s13, 0
      %p33 = por %p31, %p32
      %p34 = scmp.ne.s32.totalorder %s23, %s26
      %p35 = scmp.eq.s32.totalorder %s18, 1
      %p36 = por %p34, %p35
      %p37 = scmp.ne.s32.totalorder %s26, %s27
      %p38 = scmp.eq.s32.totalorder %s18, 0
      %p39 = por %p37, %p38
      %p40 = scmp.ne.s32.totalorder %s26, %s27
      %p41 = scmp.eq.s32.totalorder %s19, 1
      %p42 = por %p40, %p41
      %p44 = scmp.ne.s32.totalorder %s27, %s43
      %p45 = scmp.eq.s32.totalorder %s19, 0
      %p46 = por %p44, %p45
      %s48 = sadd.s32 %s47, 1
      %p51 = scmp.eq.s32.totalorder %s13, 1
      %p52 = scmp.ne.s32.totalorder %s47, %s49
      %p53 = scmp.eq.s32.totalorder %s13, 0
      %p54 = por %p52, %p53
      %p55 = scmp.ne.s32.totalorder %s47, %s49
      %p56 = scmp.eq.s32.totalorder %s18, 1
      %p57 = por %p55, %p56
      %p58 = scmp.ne.s32.totalorder %s49, %s50
      %p59 = scmp.eq.s32.totalorder %s18, 0
      %p60 = por %p58, %p59
      %p61 = scmp.ne.s32.totalorder %s49, %s50
      %p62 = scmp.eq.s32.totalorder %s19, 1
      %p63 = por %p61, %p62
      %p65 = scmp.ne.s32.totalorder %s50, %s64
      %p66 = scmp.eq.s32.totalorder %s19, 0
      %p67 = por %p65, %p66
      %s69 = sadd.s32 %s68, 1
      %p72 = scmp.eq.s32.totalorder %s13, 1
      %p73 = scmp.ne.s32.totalorder %s68, %s70
      %p74 = scmp.eq.s32.totalorder %s13, 0
      %p75 = por %p73, %p74
      %p76 = scmp.ne.s32.totalorder %s68, %s70
      %p77 = scmp.eq.s32.totalorder %s18, 1
      %p78 = por %p76, %p77
      %p79 = scmp.ne.s32.totalorder %s70, %s71
      %p80 = scmp.eq.s32.totalorder %s18, 0
      %p81 = por %p79, %p80
      %p82 = scmp.ne.s32.totalorder %s70, %s71
      %p83 = scmp.eq.s32.totalorder %s19, 1
      %p84 = por %p82, %p83
      %p86 = scmp.ne.s32.totalorder %s71, %s85
      %p87 = scmp.eq.s32.totalorder %s19, 0
      %p88 = por %p86, %p87
      %s89 = ssub.s32 %s13, %s20
      %p90 = scmp.eq.s32.totalorder %s89, 0
      %s92 = sadd.s32 %s91, 1
      %s93 = scalar_select %p90, %s91, %s92
      %p96 = pneg %p90
      %p97 = scmp.eq.s32.totalorder %s13, 1
      %p98 = por %p96, %p97
      %p99 = scmp.ne.s32.totalorder %s91, %s94
      %p100 = scmp.eq.s32.totalorder %s13, 0
      %p101 = por %p99, %p100
      %p102 = scmp.ne.s32.totalorder %s91, %s94
      %p103 = scmp.eq.s32.totalorder %s18, 1
      %p104 = por %p102, %p103
      %p105 = scmp.ne.s32.totalorder %s94, %s95
      %p106 = scmp.eq.s32.totalorder %s18, 0
      %p107 = por %p105, %p106
      %p108 = scmp.ne.s32.totalorder %s94, %s95
      %p109 = scmp.eq.s32.totalorder %s19, 1
      %p110 = por %p108, %p109
      %p112 = scmp.ne.s32.totalorder %s95, %s111
      %p113 = scmp.eq.s32.totalorder %s19, 0
      %p114 = por %p112, %p113
      %p115 = scmp.le.s32.totalorder 1, %s13
      %p116 = scmp.lt.s32.totalorder %s13, 3
      %p117 = pnand %p115, %p116
      %p118 = pneg %p117
      // Predicated region
      $region9: #{tpu_custom_call.1} parent=5 // pred_check
        _
      $region10: #{tpu_custom_call.1} parent=5 // pred_check_branch
        %120 = sbr.rel (%p117) target = $region12
      $region11: #{tpu_custom_call.1} parent=5 // pred_region
        %s121 = ssub.s32 %s13, 1
        // Predicated region
        $region13: #{tpu_custom_call.1} parent=11 // pred_check
          %p122 = pneg %p60
        $region14: #{tpu_custom_call.1} parent=11 // pred_check_branch
          %124 = sbr.rel (%p122) target = $region16
        $region15: #{tpu_custom_call.1} parent=11 // pred_region
          %s126 = ssub.s32 64, 64
          %127 = vsyncadd [#allocation5], %s126
          %s129 = sshll.u32 [#allocation4], 4
          %s130 = int_to_ptr.vmem [resolvable:$true] %s129
          %132 = dma.hbm_to_vmem [thread:$0]  %s1, 64, %s130, [#allocation5]
        $region16: #{tpu_custom_call.1} parent=11 // pred_fallthru
          _
        // Predicated region
        $region17: #{tpu_custom_call.1} parent=11 // pred_check
          %p133 = pneg %p81
        $region18: #{tpu_custom_call.1} parent=11 // pred_check_branch
          %135 = sbr.rel (%p133) target = $region20
        $region19: #{tpu_custom_call.1} parent=11 // pred_region
          _
        $region20: #{tpu_custom_call.1} parent=11 // pred_fallthru
          _
      $region12: #{tpu_custom_call.1} parent=5 // pred_fallthru
        _
      %p136 = scmp.lt.s32.totalorder %s13, 2
      // Predicated region
      $region21: #{tpu_custom_call.1} parent=5 // pred_check
        %p137 = pneg %p136
      $region22: #{tpu_custom_call.1} parent=5 // pred_check_branch
        %139 = sbr.rel (%p137) target = $region24
      $region23: #{tpu_custom_call.1} parent=5 // pred_region
        // Predicated region
        $region25: #{tpu_custom_call.1} parent=23 // pred_check
          %p140 = pneg %p33
        $region26: #{tpu_custom_call.1} parent=23 // pred_check_branch
          %142 = sbr.rel (%p140) target = $region28
        $region27: #{tpu_custom_call.1} parent=23 // pred_region
          %s143 = sand.u32 %s23, 1
          %s144 = scalar_lea.sflag [#allocation3], %s143
          %s145 = sand.u32 %s23, 1
          %s146 = smul.addr %s145, 8
          %s147 = scalar_lea.vmem [#allocation2], %s146
          %s149 = ssub.s32 128, 128
          %150 = vsyncadd %s144, %s149
          %s151 = smul.addr %s13, 2
          %s152 = smul.addr %s151, 64
          %s153 = scalar_lea.hbm %s0, %s152
          %s155 = sshll.u32 %s147, 4
          %s156 = int_to_ptr.vmem [resolvable:$true] %s155
          %158 = dma.hbm_to_vmem [thread:$0]  %s153, 128, %s156, %s144
        $region28: #{tpu_custom_call.1} parent=23 // pred_fallthru
          _
      $region24: #{tpu_custom_call.1} parent=5 // pred_fallthru
        _
      %p159 = scmp.le.s32.totalorder 1, %s13
      %p160 = scmp.lt.s32.totalorder %s13, 3
      %p161 = pnand %p159, %p160
      %p162 = pneg %p161
      // Predicated region
      $region29: #{tpu_custom_call.1} parent=5 // pred_check
        _
      $region30: #{tpu_custom_call.1} parent=5 // pred_check_branch
        %164 = sbr.rel (%p161) target = $region32
      $region31: #{tpu_custom_call.1} parent=5 // pred_region
        %s165 = ssub.s32 %s13, 1
        %s166 = sand.u32 %s26, 1
        %s167 = scalar_lea.sflag [#allocation3], %s166
        %s168 = sand.u32 %s26, 1
        %s169 = smul.addr %s168, 8
        %s170 = scalar_lea.vmem [#allocation2], %s169
        // Predicated region
        $region33: #{tpu_custom_call.1} parent=31 // pred_check
          %p171 = pneg %p39
        $region34: #{tpu_custom_call.1} parent=31 // pred_check_branch
          %173 = sbr.rel (%p171) target = $region36
        $region35: #{tpu_custom_call.1} parent=31 // pred_region
          %174 = dma.done %s167, 128
        $region36: #{tpu_custom_call.1} parent=31 // pred_fallthru
          _
        // Predicated region
        $region37: #{tpu_custom_call.1} parent=31 // pred_check
          %p175 = pneg %p60
        $region38: #{tpu_custom_call.1} parent=31 // pred_check_branch
          %177 = sbr.rel (%p175) target = $region40
        $region39: #{tpu_custom_call.1} parent=31 // pred_region
          %178 = dma.done [#allocation5], 64
        $region40: #{tpu_custom_call.1} parent=31 // pred_fallthru
          _
        %s179 = sand.u32 %s26, 1
        %s180 = scalar_lea.sflag [#allocation3], %s179
        %s181 = sand.u32 %s26, 1
        %s182 = smul.addr %s181, 8
        %s183 = scalar_lea.vmem [#allocation2], %s182
        %p184 = pneg %p39
        %p185 = pneg %p36
        %p186 = pneg %p60
        %p187 = pneg %p57
        %p188 = pneg %p81
        %p189 = pneg %p78
        %p190 = pneg %p107
        %p191 = pneg %p104
        %p192 = scmp.lt.s32.totalorder %s18, 1
        %s193 = scalar_select %p192, %s18, 1
        %s194 = smul.addr %s193, 32
        %s195 = smul.addr %s194, 4
        %s196 = scalar_lea.vmem %s3, %s195
        %p197 = scmp.lt.s32.totalorder %s18, 1
        %s198 = scalar_select %p197, %s18, 1
        %s199 = smul.addr %s198, 32
        %s200 = smul.addr %s199, 4
        %s201 = scalar_lea.vmem %s3, %s200
        %v202 = vld [vmem:[%s170] sm:$0xff]
        %v204 = vcombine.high %v202, %v202
        %206 = vxpose.xlu0.b32.start [1/16] %v202, 128
        %207 = vxpose.xlu0.b32.cont [2/16] 0.0, 128
        %208 = vxpose.xlu0.b32.cont [3/16] 0.0, 128
        %209 = vxpose.xlu0.b32.cont [4/16] 0.0, 128
        %210 = vxpose.xlu0.b32.cont [5/16] 0.0, 128
        %211 = vxpose.xlu0.b32.cont [6/16] 0.0, 128
        %212 = vxpose.xlu0.b32.cont [7/16] 0.0, 128
        %213 = vxpose.xlu0.b32.cont [8/16] 0.0, 128
        %214 = vxpose.xlu0.b32.cont [9/16] 0.0, 128
        %215 = vxpose.xlu0.b32.cont [10/16] 0.0, 128
        %216 = vxpose.xlu0.b32.cont [11/16] 0.0, 128
        %217 = vxpose.xlu0.b32.cont [12/16] 0.0, 128
        %218 = vxpose.xlu0.b32.cont [13/16] 0.0, 128
        %219 = vxpose.xlu0.b32.cont [14/16] 0.0, 128
        %220 = vxpose.xlu0.b32.cont [15/16] 0.0, 128
        %221 = vxpose.xlu0.b32.end [16/16] 0.0, 128
        %v222 = vpop.trf.xlu0
        %v223 = vpop.trf.xlu0
        %v224 = vpop.trf.xlu0
        %v225 = vpop.trf.xlu0
        %v226 = vpop.trf.xlu0
        %v227 = vpop.trf.xlu0
        %v228 = vpop.trf.xlu0
        %v229 = vpop.trf.xlu0
        %v230 = vpop.trf.xlu0
        %v231 = vpop.trf.xlu0
        %v232 = vpop.trf.xlu0
        %v233 = vpop.trf.xlu0
        %v234 = vpop.trf.xlu0
        %v235 = vpop.trf.xlu0
        %v236 = vpop.trf.xlu0
        %v237 = vpop.trf.xlu0
        %238 = vxpose.xlu0.b32.start [1/16] %v204, 128
        %239 = vxpose.xlu0.b32.cont [2/16] 0.0, 128
        %240 = vxpose.xlu0.b32.cont [3/16] 0.0, 128
        %241 = vxpose.xlu0.b32.cont [4/16] 0.0, 128
        %242 = vxpose.xlu0.b32.cont [5/16] 0.0, 128
        %243 = vxpose.xlu0.b32.cont [6/16] 0.0, 128
        %244 = vxpose.xlu0.b32.cont [7/16] 0.0, 128
        %245 = vxpose.xlu0.b32.cont [8/16] 0.0, 128
        %246 = vxpose.xlu0.b32.cont [9/16] 0.0, 128
        %247 = vxpose.xlu0.b32.cont [10/16] 0.0, 128
        %248 = vxpose.xlu0.b32.cont [11/16] 0.0, 128
        %249 = vxpose.xlu0.b32.cont [12/16] 0.0, 128
        %250 = vxpose.xlu0.b32.cont [13/16] 0.0, 128
        %251 = vxpose.xlu0.b32.cont [14/16] 0.0, 128
        %252 = vxpose.xlu0.b32.cont [15/16] 0.0, 128
        %253 = vxpose.xlu0.b32.end [16/16] 0.0, 128
        %v254 = vpop.trf.xlu0
        %v255 = vpop.trf.xlu0
        %v256 = vpop.trf.xlu0
        %v257 = vpop.trf.xlu0
        %v258 = vpop.trf.xlu0
        %v259 = vpop.trf.xlu0
        %v260 = vpop.trf.xlu0
        %v261 = vpop.trf.xlu0
        %v262 = vpop.trf.xlu0
        %v263 = vpop.trf.xlu0
        %v264 = vpop.trf.xlu0
        %v265 = vpop.trf.xlu0
        %v266 = vpop.trf.xlu0
        %v267 = vpop.trf.xlu0
        %v268 = vpop.trf.xlu0
        %v269 = vpop.trf.xlu0
        %vm270 = vcmask 31744
        %v272 = vsel %vm270, %v222, 0
        %v275 = vsel %vm270, %v223, 0
        %v278 = vsel %vm270, %v224, 0
        %v281 = vsel %vm270, %v225, 0
        %v284 = vsel %vm270, %v226, 0
        %v287 = vsel %vm270, %v227, 0
        %v290 = vsel %vm270, %v228, 0
        %v293 = vsel %vm270, %v229, 0
        %v296 = vsel %vm270, %v230, 0
        %v299 = vsel %vm270, %v231, 0
        %v302 = vsel %vm270, %v232, 0
        %v305 = vsel %vm270, %v233, 0
        %v308 = vsel %vm270, %v234, 0
        %v311 = vsel %vm270, %v235, 0
        %v314 = vsel %vm270, %v236, 0
        %v317 = vsel %vm270, %v237, 0
        %v320 = vsel %vm270, %v254, 0
        %v323 = vsel %vm270, %v255, 0
        %v326 = vsel %vm270, %v256, 0
        %v329 = vsel %vm270, %v257, 0
        %v332 = vsel %vm270, %v258, 0
        %v335 = vsel %vm270, %v259, 0
        %v338 = vsel %vm270, %v260, 0
        %v341 = vsel %vm270, %v261, 0
        %v344 = vsel %vm270, %v262, 0
        %v347 = vsel %vm270, %v263, 0
        %v350 = vsel %vm270, %v264, 0
        %v353 = vsel %vm270, %v265, 0
        %v356 = vsel %vm270, %v266, 0
        %v359 = vsel %vm270, %v267, 0
        %v362 = vsel %vm270, %v268, 0
        %v365 = vsel %vm270, %v269, 0
        %vm367 = vcmask 1043456
        %v368 = vsel %vm367, %v202, 0
        %v370 = vsel %vm367, %v204, 0
        %372 = vmatprep.subr.mxu0 %v370
        %373 = vmatpush1.msra.mxu0 %v368
        %374 = vmatprep.subr.mxu0 0.0
        %375 = vmatpush1.msra.mxu0 0.0
        %376 = vmatprep.subr.mxu0 0.0
        %377 = vmatpush1.msra.mxu0 0.0
        %378 = vmatprep.subr.mxu0 0.0
        %379 = vmatpush1.msra.mxu0 0.0
        %380 = vmatprep.subr.mxu0 0.0
        %381 = vmatpush1.msra.mxu0 0.0
        %382 = vmatprep.subr.mxu0 0.0
        %383 = vmatpush1.msra.mxu0 0.0
        %384 = vmatprep.subr.mxu0 0.0
        %385 = vmatpush1.msra.mxu0 0.0
        %386 = vmatprep.subr.mxu0 0.0
        %387 = vmatpush1.msra.mxu0 0.0
        %388 = vmatprep.subr.mxu0 0.0
        %389 = vmatpush1.msra.mxu0 0.0
        %390 = vmatprep.subr.mxu0 0.0
        %391 = vmatpush1.msra.mxu0 0.0
        %392 = vmatprep.subr.mxu0 0.0
        %393 = vmatpush1.msra.mxu0 0.0
        %394 = vmatprep.subr.mxu0 0.0
        %395 = vmatpush1.msra.mxu0 0.0
        %396 = vmatprep.subr.mxu0 0.0
        %397 = vmatpush1.msra.mxu0 0.0
        %398 = vmatprep.subr.mxu0 0.0
        %399 = vmatpush1.msra.mxu0 0.0
        %400 = vmatprep.subr.mxu0 0.0
        %401 = vmatpush1.msra.mxu0 0.0
        %402 = vmatprep.subr.mxu0 0.0
        %403 = vmatpush1.msra.mxu0 0.0
        %404 = vmatprep.subr.mxu0 0.0
        %405 = vmatpush1.msra.mxu0 0.0
        %406 = vmatprep.subr.mxu0 0.0
        %407 = vmatpush1.msra.mxu0 0.0
        %408 = vmatprep.subr.mxu0 0.0
        %409 = vmatpush1.msra.mxu0 0.0
        %410 = vmatprep.subr.mxu0 0.0
        %411 = vmatpush1.msra.mxu0 0.0
        %412 = vmatprep.subr.mxu0 0.0
        %413 = vmatpush1.msra.mxu0 0.0
        %414 = vmatprep.subr.mxu0 0.0
        %415 = vmatpush1.msra.mxu0 0.0
        %416 = vmatprep.subr.mxu0 0.0
        %417 = vmatpush1.msra.mxu0 0.0
        %418 = vmatprep.subr.mxu0 0.0
        %419 = vmatpush1.msra.mxu0 0.0
        %420 = vmatprep.subr.mxu0 0.0
        %421 = vmatpush1.msra.mxu0 0.0
        %422 = vmatprep.subr.mxu0 0.0
        %423 = vmatpush1.msra.mxu0 0.0
        %424 = vmatprep.subr.mxu0 0.0
        %425 = vmatpush1.msra.mxu0 0.0
        %426 = vmatprep.subr.mxu0 0.0
        %427 = vmatpush1.msra.mxu0 0.0
        %428 = vmatprep.subr.mxu0 0.0
        %429 = vmatpush1.msra.mxu0 0.0
        %430 = vmatprep.subr.mxu0 0.0
        %431 = vmatpush1.msra.mxu0 0.0
        %432 = vmatprep.subr.mxu0 0.0
        %433 = vmatpush1.msra.mxu0 0.0
        %434 = vmatprep.subr.mxu0 0.0
        %435 = vmatpush1.msra.mxu0 0.0
        %436 = vmatprep.mubr.f32.mxu0 0.0
        %437 = vmatmul.mubr.f32.gmra.mrb[0].mxu0 %v272
        %v438 = vpop.f32.mrb[0].mxu0
        %v439 = vadd.f32 0.0, %v438
        %v440 = vpop.f32.mrb[0].mxu0
        %v441 = vadd.f32 0.0, %v440
        %442 = vmatprep.mubr.f32.mxu0 0.0
        %443 = vmatmul.mubr.f32.gmra.mrb[0].mxu0 %v275
        %v444 = vpop.f32.mrb[0].mxu0
        %v445 = vadd.f32 0.0, %v444
        %v446 = vpop.f32.mrb[0].mxu0
        %v447 = vadd.f32 0.0, %v446
        %448 = vmatprep.mubr.f32.mxu0 0.0
        %449 = vmatmul.mubr.f32.gmra.mrb[0].mxu0 %v278
        %v450 = vpop.f32.mrb[0].mxu0
        %v451 = vadd.f32 0.0, %v450
        %v452 = vpop.f32.mrb[0].mxu0
        %v453 = vadd.f32 0.0, %v452
        %454 = vmatprep.mubr.f32.mxu0 0.0
        %455 = vmatmul.mubr.f32.gmra.mrb[0].mxu0 %v281
        %v456 = vpop.f32.mrb[0].mxu0
        %v457 = vadd.f32 0.0, %v456
        %v458 = vpop.f32.mrb[0].mxu0
        %v459 = vadd.f32 0.0, %v458
        %460 = vmatprep.mubr.f32.mxu0 0.0
        %461 = vmatmul.mubr.f32.gmra.mrb[0].mxu0 %v284
        %v462 = vpop.f32.mrb[0].mxu0
        %v463 = vadd.f32 0.0, %v462
        %v464 = vpop.f32.mrb[0].mxu0
        %v465 = vadd.f32 0.0, %v464
        %466 = vmatprep.mubr.f32.mxu0 0.0
        %467 = vmatmul.mubr.f32.gmra.mrb[0].mxu0 %v287
        %v468 = vpop.f32.mrb[0].mxu0
        %v469 = vadd.f32 0.0, %v468
        %v470 = vpop.f32.mrb[0].mxu0
        %v471 = vadd.f32 0.0, %v470
        %472 = vmatprep.mubr.f32.mxu0 0.0
        %473 = vmatmul.mubr.f32.gmra.mrb[0].mxu0 %v290
        %v474 = vpop.f32.mrb[0].mxu0
        %v475 = vadd.f32 0.0, %v474
        %v476 = vpop.f32.mrb[0].mxu0
        %v477 = vadd.f32 0.0, %v476
        %478 = vmatprep.mubr.f32.mxu0 0.0
        %479 = vmatmul.mubr.f32.gmra.mrb[0].mxu0 %v293
        %v480 = vpop.f32.mrb[0].mxu0
        %v481 = vadd.f32 0.0, %v480
        %v482 = vpop.f32.mrb[0].mxu0
        %v483 = vadd.f32 0.0, %v482
        %484 = vmatprep.mubr.f32.mxu0 0.0
        %485 = vmatmul.mubr.f32.gmra.mrb[0].mxu0 %v296
        %v486 = vpop.f32.mrb[0].mxu0
        %v487 = vadd.f32 0.0, %v486
        %v488 = vpop.f32.mrb[0].mxu0
        %v489 = vadd.f32 0.0, %v488
        %490 = vmatprep.mubr.f32.mxu0 0.0
        %491 = vmatmul.mubr.f32.gmra.mrb[0].mxu0 %v299
        %v492 = vpop.f32.mrb[0].mxu0
        %v493 = vadd.f32 0.0, %v492
        %v494 = vpop.f32.mrb[0].mxu0
        %v495 = vadd.f32 0.0, %v494
        %496 = vmatprep.mubr.f32.mxu0 0.0
        %497 = vmatmul.mubr.f32.gmra.mrb[0].mxu0 %v302
        %v498 = vpop.f32.mrb[0].mxu0
        %v499 = vadd.f32 0.0, %v498
        %v500 = vpop.f32.mrb[0].mxu0
        %v501 = vadd.f32 0.0, %v500
        %502 = vmatprep.mubr.f32.mxu0 0.0
        %503 = vmatmul.mubr.f32.gmra.mrb[0].mxu0 %v305
        %v504 = vpop.f32.mrb[0].mxu0
        %v505 = vadd.f32 0.0, %v504
        %v506 = vpop.f32.mrb[0].mxu0
        %v507 = vadd.f32 0.0, %v506
        %508 = vmatprep.mubr.f32.mxu0 0.0
        %509 = vmatmul.mubr.f32.gmra.mrb[0].mxu0 %v308
        %v510 = vpop.f32.mrb[0].mxu0
        %v511 = vadd.f32 0.0, %v510
        %v512 = vpop.f32.mrb[0].mxu0
        %v513 = vadd.f32 0.0, %v512
        %514 = vmatprep.mubr.f32.mxu0 0.0
        %515 = vmatmul.mubr.f32.gmra.mrb[0].mxu0 %v311
        %v516 = vpop.f32.mrb[0].mxu0
        %v517 = vadd.f32 0.0, %v516
        %v518 = vpop.f32.mrb[0].mxu0
        %v519 = vadd.f32 0.0, %v518
        %520 = vmatprep.mubr.f32.mxu0 0.0
        %521 = vmatmul.mubr.f32.gmra.mrb[0].mxu0 %v314
        %v522 = vpop.f32.mrb[0].mxu0
        %v523 = vadd.f32 0.0, %v522
        %v524 = vpop.f32.mrb[0].mxu0
        %v525 = vadd.f32 0.0, %v524
        %526 = vmatprep.mubr.f32.mxu0 0.0
        %527 = vmatmul.mubr.f32.gmra.mrb[0].mxu0 %v317
        %v528 = vpop.f32.mrb[0].mxu0
        %v529 = vadd.f32 0.0, %v528
        %v530 = vpop.f32.mrb[0].mxu0
        %v531 = vadd.f32 0.0, %v530
        %532 = vmatprep.mubr.f32.mxu0 0.0
        %533 = vmatmul.mubr.f32.gmra.mrb[0].mxu0 %v320
        %v534 = vpop.f32.mrb[0].mxu0
        %v535 = vadd.f32 0.0, %v534
        %v536 = vpop.f32.mrb[0].mxu0
        %v537 = vadd.f32 0.0, %v536
        %538 = vmatprep.mubr.f32.mxu0 0.0
        %539 = vmatmul.mubr.f32.gmra.mrb[0].mxu0 %v323
        %v540 = vpop.f32.mrb[0].mxu0
        %v541 = vadd.f32 0.0, %v540
        %v542 = vpop.f32.mrb[0].mxu0
        %v543 = vadd.f32 0.0, %v542
        %544 = vmatprep.mubr.f32.mxu0 0.0
        %545 = vmatmul.mubr.f32.gmra.mrb[0].mxu0 %v326
        %v546 = vpop.f32.mrb[0].mxu0
        %v547 = vadd.f32 0.0, %v546
        %v548 = vpop.f32.mrb[0].mxu0
        %v549 = vadd.f32 0.0, %v548
        %550 = vmatprep.mubr.f32.mxu0 0.0
        %551 = vmatmul.mubr.f32.gmra.mrb[0].mxu0 %v329
        %v552 = vpop.f32.mrb[0].mxu0
        %v553 = vadd.f32 0.0, %v552
        %v554 = vpop.f32.mrb[0].mxu0
        %v555 = vadd.f32 0.0, %v554
        %556 = vmatprep.mubr.f32.mxu0 0.0
        %557 = vmatmul.mubr.f32.gmra.mrb[0].mxu0 %v332
        %v558 = vpop.f32.mrb[0].mxu0
        %v559 = vadd.f32 0.0, %v558
        %v560 = vpop.f32.mrb[0].mxu0
        %v561 = vadd.f32 0.0, %v560
        %562 = vmatprep.mubr.f32.mxu0 0.0
        %563 = vmatmul.mubr.f32.gmra.mrb[0].mxu0 %v335
        %v564 = vpop.f32.mrb[0].mxu0
        %v565 = vadd.f32 0.0, %v564
        %v566 = vpop.f32.mrb[0].mxu0
        %v567 = vadd.f32 0.0, %v566
        %568 = vmatprep.mubr.f32.mxu0 0.0
        %569 = vmatmul.mubr.f32.gmra.mrb[0].mxu0 %v338
        %v570 = vpop.f32.mrb[0].mxu0
        %v571 = vadd.f32 0.0, %v570
        %v572 = vpop.f32.mrb[0].mxu0
        %v573 = vadd.f32 0.0, %v572
        %574 = vmatprep.mubr.f32.mxu0 0.0
        %575 = vmatmul.mubr.f32.gmra.mrb[0].mxu0 %v341
        %v576 = vpop.f32.mrb[0].mxu0
        %v577 = vadd.f32 0.0, %v576
        %v578 = vpop.f32.mrb[0].mxu0
        %v579 = vadd.f32 0.0, %v578
        %580 = vmatprep.mubr.f32.mxu0 0.0
        %581 = vmatmul.mubr.f32.gmra.mrb[0].mxu0 %v344
        %v582 = vpop.f32.mrb[0].mxu0
        %v583 = vadd.f32 0.0, %v582
        %v584 = vpop.f32.mrb[0].mxu0
        %v585 = vadd.f32 0.0, %v584
        %586 = vmatprep.mubr.f32.mxu0 0.0
        %587 = vmatmul.mubr.f32.gmra.mrb[0].mxu0 %v347
        %v588 = vpop.f32.mrb[0].mxu0
        %v589 = vadd.f32 0.0, %v588
        %v590 = vpop.f32.mrb[0].mxu0
        %v591 = vadd.f32 0.0, %v590
        %592 = vmatprep.mubr.f32.mxu0 0.0
        %593 = vmatmul.mubr.f32.gmra.mrb[0].mxu0 %v350
        %v594 = vpop.f32.mrb[0].mxu0
        %v595 = vadd.f32 0.0, %v594
        %v596 = vpop.f32.mrb[0].mxu0
        %v597 = vadd.f32 0.0, %v596
        %598 = vmatprep.mubr.f32.mxu0 0.0
        %599 = vmatmul.mubr.f32.gmra.mrb[0].mxu0 %v353
        %v600 = vpop.f32.mrb[0].mxu0
        %v601 = vadd.f32 0.0, %v600
        %v602 = vpop.f32.mrb[0].mxu0
        %v603 = vadd.f32 0.0, %v602
        %604 = vmatprep.mubr.f32.mxu0 0.0
        %605 = vmatmul.mubr.f32.gmra.mrb[0].mxu0 %v356
        %v606 = vpop.f32.mrb[0].mxu0
        %v607 = vadd.f32 0.0, %v606
        %v608 = vpop.f32.mrb[0].mxu0
        %v609 = vadd.f32 0.0, %v608
        %610 = vmatprep.mubr.f32.mxu0 0.0
        %611 = vmatmul.mubr.f32.gmra.mrb[0].mxu0 %v359
        %v612 = vpop.f32.mrb[0].mxu0
        %v613 = vadd.f32 0.0, %v612
        %v614 = vpop.f32.mrb[0].mxu0
        %v615 = vadd.f32 0.0, %v614
        %616 = vmatprep.mubr.f32.mxu0 0.0
        %617 = vmatmul.mubr.f32.gmra.mrb[0].mxu0 %v362
        %v618 = vpop.f32.mrb[0].mxu0
        %v619 = vadd.f32 0.0, %v618
        %v620 = vpop.f32.mrb[0].mxu0
        %v621 = vadd.f32 0.0, %v620
        %622 = vmatprep.mubr.f32.mxu0 0.0
        %623 = vmatmul.mubr.f32.gmra.mrb[0].mxu0 %v365
        %v624 = vpop.f32.mrb[0].mxu0
        %v625 = vadd.f32 0.0, %v624
        %v626 = vpop.f32.mrb[0].mxu0
        %v627 = vadd.f32 0.0, %v626
        %628 = vdwg.mxu0
        %v629 = vmax.f32 %v439, %v441
        %630 = vmax.xlane.f32.xlu0 %v629
        %v631 = vpop.xlane.xlu0 %630
        %v632 = vmax.f32 %v445, %v447
        %633 = vmax.xlane.f32.xlu0 %v632
        %v634 = vpop.xlane.xlu0 %633
        %v635 = vmax.f32 %v451, %v453
        %636 = vmax.xlane.f32.xlu0 %v635
        %v637 = vpop.xlane.xlu0 %636
        %v638 = vmax.f32 %v457, %v459
        %639 = vmax.xlane.f32.xlu0 %v638
        %v640 = vpop.xlane.xlu0 %639
        %v641 = vmax.f32 %v463, %v465
        %642 = vmax.xlane.f32.xlu0 %v641
        %v643 = vpop.xlane.xlu0 %642
        %v644 = vmax.f32 %v469, %v471
        %645 = vmax.xlane.f32.xlu0 %v644
        %v646 = vpop.xlane.xlu0 %645
        %v647 = vmax.f32 %v475, %v477
        %648 = vmax.xlane.f32.xlu0 %v647
        %v649 = vpop.xlane.xlu0 %648
        %v650 = vmax.f32 %v481, %v483
        %651 = vmax.xlane.f32.xlu0 %v650
        %v652 = vpop.xlane.xlu0 %651
        %v653 = vmax.f32 %v487, %v489
        %654 = vmax.xlane.f32.xlu0 %v653
        %v655 = vpop.xlane.xlu0 %654
        %v656 = vmax.f32 %v493, %v495
        %657 = vmax.xlane.f32.xlu0 %v656
        %v658 = vpop.xlane.xlu0 %657
        %v659 = vmax.f32 %v499, %v501
        %660 = vmax.xlane.f32.xlu0 %v659
        %v661 = vpop.xlane.xlu0 %660
        %v662 = vmax.f32 %v505, %v507
        %663 = vmax.xlane.f32.xlu0 %v662
        %v664 = vpop.xlane.xlu0 %663
        %v665 = vmax.f32 %v511, %v513
        %666 = vmax.xlane.f32.xlu0 %v665
        %v667 = vpop.xlane.xlu0 %666
        %v668 = vmax.f32 %v517, %v519
        %669 = vmax.xlane.f32.xlu0 %v668
        %v670 = vpop.xlane.xlu0 %669
        %v671 = vmax.f32 %v523, %v525
        %672 = vmax.xlane.f32.xlu0 %v671
        %v673 = vpop.xlane.xlu0 %672
        %v674 = vmax.f32 %v529, %v531
        %675 = vmax.xlane.f32.xlu0 %v674
        %v676 = vpop.xlane.xlu0 %675
        %v677 = vmax.f32 %v535, %v537
        %678 = vmax.xlane.f32.xlu0 %v677
        %v679 = vpop.xlane.xlu0 %678
        %v680 = vmax.f32 %v541, %v543
        %681 = vmax.xlane.f32.xlu0 %v680
        %v682 = vpop.xlane.xlu0 %681
        %v683 = vmax.f32 %v547, %v549
        %684 = vmax.xlane.f32.xlu0 %v683
        %v685 = vpop.xlane.xlu0 %684
        %v686 = vmax.f32 %v553, %v555
        %687 = vmax.xlane.f32.xlu0 %v686
        %v688 = vpop.xlane.xlu0 %687
        %v689 = vmax.f32 %v559, %v561
        %690 = vmax.xlane.f32.xlu0 %v689
        %v691 = vpop.xlane.xlu0 %690
        %v692 = vmax.f32 %v565, %v567
        %693 = vmax.xlane.f32.xlu0 %v692
        %v694 = vpop.xlane.xlu0 %693
        %v695 = vmax.f32 %v571, %v573
        %696 = vmax.xlane.f32.xlu0 %v695
        %v697 = vpop.xlane.xlu0 %696
        %v698 = vmax.f32 %v577, %v579
        %699 = vmax.xlane.f32.xlu0 %v698
        %v700 = vpop.xlane.xlu0 %699
        %v701 = vmax.f32 %v583, %v585
        %702 = vmax.xlane.f32.xlu0 %v701
        %v703 = vpop.xlane.xlu0 %702
        %v704 = vmax.f32 %v589, %v591
        %705 = vmax.xlane.f32.xlu0 %v704
        %v706 = vpop.xlane.xlu0 %705
        %v707 = vmax.f32 %v595, %v597
        %708 = vmax.xlane.f32.xlu0 %v707
        %v709 = vpop.xlane.xlu0 %708
        %v710 = vmax.f32 %v601, %v603
        %711 = vmax.xlane.f32.xlu0 %v710
        %v712 = vpop.xlane.xlu0 %711
        %v713 = vmax.f32 %v607, %v609
        %714 = vmax.xlane.f32.xlu0 %v713
        %v715 = vpop.xlane.xlu0 %714
        %v716 = vmax.f32 %v613, %v615
        %717 = vmax.xlane.f32.xlu0 %v716
        %v718 = vpop.xlane.xlu0 %717
        %v719 = vmax.f32 %v619, %v621
        %720 = vmax.xlane.f32.xlu0 %v719
        %v721 = vpop.xlane.xlu0 %720
        %v722 = vmax.f32 %v625, %v627
        %723 = vmax.xlane.f32.xlu0 %v722
        %v724 = vpop.xlane.xlu0 %723
        %v725 = vsub.f32 %v439, %v631
        %v726 = vsub.f32 %v441, %v631
        %v727 = vsub.f32 %v445, %v634
        %v728 = vsub.f32 %v447, %v634
        %v729 = vsub.f32 %v451, %v637
        %v730 = vsub.f32 %v453, %v637
        %v731 = vsub.f32 %v457, %v640
        %v732 = vsub.f32 %v459, %v640
        %v733 = vsub.f32 %v463, %v643
        %v734 = vsub.f32 %v465, %v643
        %v735 = vsub.f32 %v469, %v646
        %v736 = vsub.f32 %v471, %v646
        %v737 = vsub.f32 %v475, %v649
        %v738 = vsub.f32 %v477, %v649
        %v739 = vsub.f32 %v481, %v652
        %v740 = vsub.f32 %v483, %v652
        %v741 = vsub.f32 %v487, %v655
        %v742 = vsub.f32 %v489, %v655
        %v743 = vsub.f32 %v493, %v658
        %v744 = vsub.f32 %v495, %v658
        %v745 = vsub.f32 %v499, %v661
        %v746 = vsub.f32 %v501, %v661
        %v747 = vsub.f32 %v505, %v664
        %v748 = vsub.f32 %v507, %v664
        %v749 = vsub.f32 %v511, %v667
        %v750 = vsub.f32 %v513, %v667
        %v751 = vsub.f32 %v517, %v670
        %v752 = vsub.f32 %v519, %v670
        %v753 = vsub.f32 %v523, %v673
        %v754 = vsub.f32 %v525, %v673
        %v755 = vsub.f32 %v529, %v676
        %v756 = vsub.f32 %v531, %v676
        %v757 = vsub.f32 %v535, %v679
        %v758 = vsub.f32 %v537, %v679
        %v759 = vsub.f32 %v541, %v682
        %v760 = vsub.f32 %v543, %v682
        %v761 = vsub.f32 %v547, %v685
        %v762 = vsub.f32 %v549, %v685
        %v763 = vsub.f32 %v553, %v688
        %v764 = vsub.f32 %v555, %v688
        %v765 = vsub.f32 %v559, %v691
        %v766 = vsub.f32 %v561, %v691
        %v767 = vsub.f32 %v565, %v694
        %v768 = vsub.f32 %v567, %v694
        %v769 = vsub.f32 %v571, %v697
        %v770 = vsub.f32 %v573, %v697
        %v771 = vsub.f32 %v577, %v700
        %v772 = vsub.f32 %v579, %v700
        %v773 = vsub.f32 %v583, %v703
        %v774 = vsub.f32 %v585, %v703
        %v775 = vsub.f32 %v589, %v706
        %v776 = vsub.f32 %v591, %v706
        %v777 = vsub.f32 %v595, %v709
        %v778 = vsub.f32 %v597, %v709
        %v779 = vsub.f32 %v601, %v712
        %v780 = vsub.f32 %v603, %v712
        %v781 = vsub.f32 %v607, %v715
        %v782 = vsub.f32 %v609, %v715
        %v783 = vsub.f32 %v613, %v718
        %v784 = vsub.f32 %v615, %v718
        %v785 = vsub.f32 %v619, %v721
        %v786 = vsub.f32 %v621, %v721
        %v787 = vsub.f32 %v625, %v724
        %v788 = vsub.f32 %v627, %v724
        %v789 = vmul.f32 %v725, 1.442695
        %v790 = vpow.pop %v789
        %v791 = vmul.f32 %v726, 1.442695
        %v792 = vpow.pop %v791
        %v793 = vmul.f32 %v727, 1.442695
        %v794 = vpow.pop %v793
        %v795 = vmul.f32 %v728, 1.442695
        %v796 = vpow.pop %v795
        %v797 = vmul.f32 %v729, 1.442695
        %v798 = vpow.pop %v797
        %v799 = vmul.f32 %v730, 1.442695
        %v800 = vpow.pop %v799
        %v801 = vmul.f32 %v731, 1.442695
        %v802 = vpow.pop %v801
        %v803 = vmul.f32 %v732, 1.442695
        %v804 = vpow.pop %v803
        %v805 = vmul.f32 %v733, 1.442695
        %v806 = vpow.pop %v805
        %v807 = vmul.f32 %v734, 1.442695
        %v808 = vpow.pop %v807
        %v809 = vmul.f32 %v735, 1.442695
        %v810 = vpow.pop %v809
        %v811 = vmul.f32 %v736, 1.442695
        %v812 = vpow.pop %v811
        %v813 = vmul.f32 %v737, 1.442695
        %v814 = vpow.pop %v813
        %v815 = vmul.f32 %v738, 1.442695
        %v816 = vpow.pop %v815
        %v817 = vmul.f32 %v739, 1.442695
        %v818 = vpow.pop %v817
        %v819 = vmul.f32 %v740, 1.442695
        %v820 = vpow.pop %v819
        %v821 = vmul.f32 %v741, 1.442695
        %v822 = vpow.pop %v821
        %v823 = vmul.f32 %v742, 1.442695
        %v824 = vpow.pop %v823
        %v825 = vmul.f32 %v743, 1.442695
        %v826 = vpow.pop %v825
        %v827 = vmul.f32 %v744, 1.442695
        %v828 = vpow.pop %v827
        %v829 = vmul.f32 %v745, 1.442695
        %v830 = vpow.pop %v829
        %v831 = vmul.f32 %v746, 1.442695
        %v832 = vpow.pop %v831
        %v833 = vmul.f32 %v747, 1.442695
        %v834 = vpow.pop %v833
        %v835 = vmul.f32 %v748, 1.442695
        %v836 = vpow.pop %v835
        %v837 = vmul.f32 %v749, 1.442695
        %v838 = vpow.pop %v837
        %v839 = vmul.f32 %v750, 1.442695
        %v840 = vpow.pop %v839
        %v841 = vmul.f32 %v751, 1.442695
        %v842 = vpow.pop %v841
        %v843 = vmul.f32 %v752, 1.442695
        %v844 = vpow.pop %v843
        %v845 = vmul.f32 %v753, 1.442695
        %v846 = vpow.pop %v845
        %v847 = vmul.f32 %v754, 1.442695
        %v848 = vpow.pop %v847
        %v849 = vmul.f32 %v755, 1.442695
        %v850 = vpow.pop %v849
        %v851 = vmul.f32 %v756, 1.442695
        %v852 = vpow.pop %v851
        %v853 = vmul.f32 %v757, 1.442695
        %v854 = vpow.pop %v853
        %v855 = vmul.f32 %v758, 1.442695
        %v856 = vpow.pop %v855
        %v857 = vmul.f32 %v759, 1.442695
        %v858 = vpow.pop %v857
        %v859 = vmul.f32 %v760, 1.442695
        %v860 = vpow.pop %v859
        %v861 = vmul.f32 %v761, 1.442695
        %v862 = vpow.pop %v861
        %v863 = vmul.f32 %v762, 1.442695
        %v864 = vpow.pop %v863
        %v865 = vmul.f32 %v763, 1.442695
        %v866 = vpow.pop %v865
        %v867 = vmul.f32 %v764, 1.442695
        %v868 = vpow.pop %v867
        %v869 = vmul.f32 %v765, 1.442695
        %v870 = vpow.pop %v869
        %v871 = vmul.f32 %v766, 1.442695
        %v872 = vpow.pop %v871
        %v873 = vmul.f32 %v767, 1.442695
        %v874 = vpow.pop %v873
        %v875 = vmul.f32 %v768, 1.442695
        %v876 = vpow.pop %v875
        %v877 = vmul.f32 %v769, 1.442695
        %v878 = vpow.pop %v877
        %v879 = vmul.f32 %v770, 1.442695
        %v880 = vpow.pop %v879
        %v881 = vmul.f32 %v771, 1.442695
        %v882 = vpow.pop %v881
        %v883 = vmul.f32 %v772, 1.442695
        %v884 = vpow.pop %v883
        %v885 = vmul.f32 %v773, 1.442695
        %v886 = vpow.pop %v885
        %v887 = vmul.f32 %v774, 1.442695
        %v888 = vpow.pop %v887
        %v889 = vmul.f32 %v775, 1.442695
        %v890 = vpow.pop %v889
        %v891 = vmul.f32 %v776, 1.442695
        %v892 = vpow.pop %v891
        %v893 = vmul.f32 %v777, 1.442695
        %v894 = vpow.pop %v893
        %v895 = vmul.f32 %v778, 1.442695
        %v896 = vpow.pop %v895
        %v897 = vmul.f32 %v779, 1.442695
        %v898 = vpow.pop %v897
        %v899 = vmul.f32 %v780, 1.442695
        %v900 = vpow.pop %v899
        %v901 = vmul.f32 %v781, 1.442695
        %v902 = vpow.pop %v901
        %v903 = vmul.f32 %v782, 1.442695
        %v904 = vpow.pop %v903
        %v905 = vmul.f32 %v783, 1.442695
        %v906 = vpow.pop %v905
        %v907 = vmul.f32 %v784, 1.442695
        %v908 = vpow.pop %v907
        %v909 = vmul.f32 %v785, 1.442695
        %v910 = vpow.pop %v909
        %v911 = vmul.f32 %v786, 1.442695
        %v912 = vpow.pop %v911
        %v913 = vmul.f32 %v787, 1.442695
        %v914 = vpow.pop %v913
        %v915 = vmul.f32 %v788, 1.442695
        %v916 = vpow.pop %v915
        %v917 = vadd.f32 %v790, %v792
        %918 = vadd.xlane.f32.xlu0 %v917
        %v919 = vpop.xlane.xlu0 %918
        %v920 = vadd.f32 %v794, %v796
        %921 = vadd.xlane.f32.xlu0 %v920
        %v922 = vpop.xlane.xlu0 %921
        %v923 = vadd.f32 %v798, %v800
        %924 = vadd.xlane.f32.xlu0 %v923
        %v925 = vpop.xlane.xlu0 %924
        %v926 = vadd.f32 %v802, %v804
        %927 = vadd.xlane.f32.xlu0 %v926
        %v928 = vpop.xlane.xlu0 %927
        %v929 = vadd.f32 %v806, %v808
        %930 = vadd.xlane.f32.xlu0 %v929
        %v931 = vpop.xlane.xlu0 %930
        %v932 = vadd.f32 %v810, %v812
        %933 = vadd.xlane.f32.xlu0 %v932
        %v934 = vpop.xlane.xlu0 %933
        %v935 = vadd.f32 %v814, %v816
        %936 = vadd.xlane.f32.xlu0 %v935
        %v937 = vpop.xlane.xlu0 %936
        %v938 = vadd.f32 %v818, %v820
        %939 = vadd.xlane.f32.xlu0 %v938
        %v940 = vpop.xlane.xlu0 %939
        %v941 = vadd.f32 %v822, %v824
        %942 = vadd.xlane.f32.xlu0 %v941
        %v943 = vpop.xlane.xlu0 %942
        %v944 = vadd.f32 %v826, %v828
        %945 = vadd.xlane.f32.xlu0 %v944
        %v946 = vpop.xlane.xlu0 %945
        %v947 = vadd.f32 %v830, %v832
        %948 = vadd.xlane.f32.xlu0 %v947
        %v949 = vpop.xlane.xlu0 %948
        %v950 = vadd.f32 %v834, %v836
        %951 = vadd.xlane.f32.xlu0 %v950
        %v952 = vpop.xlane.xlu0 %951
        %v953 = vadd.f32 %v838, %v840
        %954 = vadd.xlane.f32.xlu0 %v953
        %v955 = vpop.xlane.xlu0 %954
        %v956 = vadd.f32 %v842, %v844
        %957 = vadd.xlane.f32.xlu0 %v956
        %v958 = vpop.xlane.xlu0 %957
        %v959 = vadd.f32 %v846, %v848
        %960 = vadd.xlane.f32.xlu0 %v959
        %v961 = vpop.xlane.xlu0 %960
        %v962 = vadd.f32 %v850, %v852
        %963 = vadd.xlane.f32.xlu0 %v962
        %v964 = vpop.xlane.xlu0 %963
        %v965 = vadd.f32 %v854, %v856
        %966 = vadd.xlane.f32.xlu0 %v965
        %v967 = vpop.xlane.xlu0 %966
        %v968 = vadd.f32 %v858, %v860
        %969 = vadd.xlane.f32.xlu0 %v968
        %v970 = vpop.xlane.xlu0 %969
        %v971 = vadd.f32 %v862, %v864
        %972 = vadd.xlane.f32.xlu0 %v971
        %v973 = vpop.xlane.xlu0 %972
        %v974 = vadd.f32 %v866, %v868
        %975 = vadd.xlane.f32.xlu0 %v974
        %v976 = vpop.xlane.xlu0 %975
        %v977 = vadd.f32 %v870, %v872
        %978 = vadd.xlane.f32.xlu0 %v977
        %v979 = vpop.xlane.xlu0 %978
        %v980 = vadd.f32 %v874, %v876
        %981 = vadd.xlane.f32.xlu0 %v980
        %v982 = vpop.xlane.xlu0 %981
        %v983 = vadd.f32 %v878, %v880
        %984 = vadd.xlane.f32.xlu0 %v983
        %v985 = vpop.xlane.xlu0 %984
        %v986 = vadd.f32 %v882, %v884
        %987 = vadd.xlane.f32.xlu0 %v986
        %v988 = vpop.xlane.xlu0 %987
        %v989 = vadd.f32 %v886, %v888
        %990 = vadd.xlane.f32.xlu0 %v989
        %v991 = vpop.xlane.xlu0 %990
        %v992 = vadd.f32 %v890, %v892
        %993 = vadd.xlane.f32.xlu0 %v992
        %v994 = vpop.xlane.xlu0 %993
        %v995 = vadd.f32 %v894, %v896
        %996 = vadd.xlane.f32.xlu0 %v995
        %v997 = vpop.xlane.xlu0 %996
        %v998 = vadd.f32 %v898, %v900
        %999 = vadd.xlane.f32.xlu0 %v998
        %v1000 = vpop.xlane.xlu0 %999
        %v1001 = vadd.f32 %v902, %v904
        %1002 = vadd.xlane.f32.xlu0 %v1001
        %v1003 = vpop.xlane.xlu0 %1002
        %v1004 = vadd.f32 %v906, %v908
        %1005 = vadd.xlane.f32.xlu0 %v1004
        %v1006 = vpop.xlane.xlu0 %1005
        %v1007 = vadd.f32 %v910, %v912
        %1008 = vadd.xlane.f32.xlu0 %v1007
        %v1009 = vpop.xlane.xlu0 %1008
        %v1010 = vadd.f32 %v914, %v916
        %1011 = vadd.xlane.f32.xlu0 %v1010
        %v1012 = vpop.xlane.xlu0 %1011
        %v1013 = vld [vmem:[#allocation4] sm:$0xf]
        %v1014 = vld [vmem:[%s2] sm:$0x1]
        %v1016 = vlaneseq
        %v1017 = vshrl.u32 %v1016, 7
        %v1018 = vsub.s32 0, %v1017
        %v1019 = vrot.slane %v1014, %v1018
        %v1022 = vsel %vm270, %v1013, 0
        %1024 = vmatprep.subr.mxu0 0.0
        %1025 = vmatpush1.xpose.msra.mxu0 %v1022
        %1026 = vmatprep.subr.mxu0 0.0
        %1027 = vmatpush1.xpose.msra.mxu0 0.0
        %1028 = vmatprep.subr.mxu0 0.0
        %1029 = vmatpush1.xpose.msra.mxu0 0.0
        %1030 = vmatprep.subr.mxu0 0.0
        %1031 = vmatpush1.xpose.msra.mxu0 0.0
        %1032 = vmatprep.subr.mxu0 0.0
        %1033 = vmatpush1.xpose.msra.mxu0 0.0
        %1034 = vmatprep.subr.mxu0 0.0
        %1035 = vmatpush1.xpose.msra.mxu0 0.0
        %1036 = vmatprep.subr.mxu0 0.0
        %1037 = vmatpush1.xpose.msra.mxu0 0.0
        %1038 = vmatprep.subr.mxu0 0.0
        %1039 = vmatpush1.xpose.msra.mxu0 0.0
        %1040 = vmatprep.subr.mxu0 0.0
        %1041 = vmatpush1.xpose.msra.mxu0 0.0
        %1042 = vmatprep.subr.mxu0 0.0
        %1043 = vmatpush1.xpose.msra.mxu0 0.0
        %1044 = vmatprep.subr.mxu0 0.0
        %1045 = vmatpush1.xpose.msra.mxu0 0.0
        %1046 = vmatprep.subr.mxu0 0.0
        %1047 = vmatpush1.xpose.msra.mxu0 0.0
        %1048 = vmatprep.subr.mxu0 0.0
        %1049 = vmatpush1.xpose.msra.mxu0 0.0
        %1050 = vmatprep.subr.mxu0 0.0
        %1051 = vmatpush1.xpose.msra.mxu0 0.0
        %1052 = vmatprep.subr.mxu0 0.0
        %1053 = vmatpush1.xpose.msra.mxu0 0.0
        %1054 = vmatprep.subr.mxu0 0.0
        %1055 = vmatpush1.xpose.msra.mxu0 0.0
        %1056 = vmatprep.subr.mxu0 0.0
        %1057 = vmatpush1.xpose.msra.mxu0 0.0
        %1058 = vmatprep.subr.mxu0 0.0
        %1059 = vmatpush1.xpose.msra.mxu0 0.0
        %1060 = vmatprep.subr.mxu0 0.0
        %1061 = vmatpush1.xpose.msra.mxu0 0.0
        %1062 = vmatprep.subr.mxu0 0.0
        %1063 = vmatpush1.xpose.msra.mxu0 0.0
        %1064 = vmatprep.subr.mxu0 0.0
        %1065 = vmatpush1.xpose.msra.mxu0 0.0
        %1066 = vmatprep.subr.mxu0 0.0
        %1067 = vmatpush1.xpose.msra.mxu0 0.0
        %1068 = vmatprep.subr.mxu0 0.0
        %1069 = vmatpush1.xpose.msra.mxu0 0.0
        %1070 = vmatprep.subr.mxu0 0.0
        %1071 = vmatpush1.xpose.msra.mxu0 0.0
        %1072 = vmatprep.subr.mxu0 0.0
        %1073 = vmatpush1.xpose.msra.mxu0 0.0
        %1074 = vmatprep.subr.mxu0 0.0
        %1075 = vmatpush1.xpose.msra.mxu0 0.0
        %1076 = vmatprep.subr.mxu0 0.0
        %1077 = vmatpush1.xpose.msra.mxu0 0.0
        %1078 = vmatprep.subr.mxu0 0.0
        %1079 = vmatpush1.xpose.msra.mxu0 0.0
        %1080 = vmatprep.subr.mxu0 0.0
        %1081 = vmatpush1.xpose.msra.mxu0 0.0
        %1082 = vmatprep.subr.mxu0 0.0
        %1083 = vmatpush1.xpose.msra.mxu0 0.0
        %1084 = vmatprep.subr.mxu0 0.0
        %1085 = vmatpush1.xpose.msra.mxu0 0.0
        %1086 = vmatprep.subr.mxu0 0.0
        %1087 = vmatpush1.xpose.msra.mxu0 0.0
        %1088 = vmatprep.mubr.f32.mxu0 0.0
        %1089 = vmatmul.mubr.f32.gmra.mrb[0].mxu0 %v272
        %v1090 = vpop.f32.mrb[0].mxu0
        %v1091 = vadd.f32 %v1019, %v1090
        %v1092 = vpop.f32.mrb[0].mxu0
        %1093 = vmatprep.mubr.f32.mxu0 0.0
        %1094 = vmatmul.mubr.f32.gmra.mrb[0].mxu0 %v275
        %v1095 = vpop.f32.mrb[0].mxu0
        %v1096 = vadd.f32 %v1019, %v1095
        %v1097 = vpop.f32.mrb[0].mxu0
        %1098 = vmatprep.mubr.f32.mxu0 0.0
        %1099 = vmatmul.mubr.f32.gmra.mrb[0].mxu0 %v278
        %v1100 = vpop.f32.mrb[0].mxu0
        %v1101 = vadd.f32 %v1019, %v1100
        %v1102 = vpop.f32.mrb[0].mxu0
        %1103 = vmatprep.mubr.f32.mxu0 0.0
        %1104 = vmatmul.mubr.f32.gmra.mrb[0].mxu0 %v281
        %v1105 = vpop.f32.mrb[0].mxu0
        %v1106 = vadd.f32 %v1019, %v1105
        %v1107 = vpop.f32.mrb[0].mxu0
        %1108 = vmatprep.mubr.f32.mxu0 0.0
        %1109 = vmatmul.mubr.f32.gmra.mrb[0].mxu0 %v284
        %v1110 = vpop.f32.mrb[0].mxu0
        %v1111 = vadd.f32 %v1019, %v1110
        %v1112 = vpop.f32.mrb[0].mxu0
        %1113 = vmatprep.mubr.f32.mxu0 0.0
        %1114 = vmatmul.mubr.f32.gmra.mrb[0].mxu0 %v287
        %v1115 = vpop.f32.mrb[0].mxu0
        %v1116 = vadd.f32 %v1019, %v1115
        %v1117 = vpop.f32.mrb[0].mxu0
        %1118 = vmatprep.mubr.f32.mxu0 0.0
        %1119 = vmatmul.mubr.f32.gmra.mrb[0].mxu0 %v290
        %v1120 = vpop.f32.mrb[0].mxu0
        %v1121 = vadd.f32 %v1019, %v1120
        %v1122 = vpop.f32.mrb[0].mxu0
        %1123 = vmatprep.mubr.f32.mxu0 0.0
        %1124 = vmatmul.mubr.f32.gmra.mrb[0].mxu0 %v293
        %v1125 = vpop.f32.mrb[0].mxu0
        %v1126 = vadd.f32 %v1019, %v1125
        %v1127 = vpop.f32.mrb[0].mxu0
        %1128 = vmatprep.mubr.f32.mxu0 0.0
        %1129 = vmatmul.mubr.f32.gmra.mrb[0].mxu0 %v296
        %v1130 = vpop.f32.mrb[0].mxu0
        %v1131 = vadd.f32 %v1019, %v1130
        %v1132 = vpop.f32.mrb[0].mxu0
        %1133 = vmatprep.mubr.f32.mxu0 0.0
        %1134 = vmatmul.mubr.f32.gmra.mrb[0].mxu0 %v299
        %v1135 = vpop.f32.mrb[0].mxu0
        %v1136 = vadd.f32 %v1019, %v1135
        %v1137 = vpop.f32.mrb[0].mxu0
        %1138 = vmatprep.mubr.f32.mxu0 0.0
        %1139 = vmatmul.mubr.f32.gmra.mrb[0].mxu0 %v302
        %v1140 = vpop.f32.mrb[0].mxu0
        %v1141 = vadd.f32 %v1019, %v1140
        %v1142 = vpop.f32.mrb[0].mxu0
        %1143 = vmatprep.mubr.f32.mxu0 0.0
        %1144 = vmatmul.mubr.f32.gmra.mrb[0].mxu0 %v305
        %v1145 = vpop.f32.mrb[0].mxu0
        %v1146 = vadd.f32 %v1019, %v1145
        %v1147 = vpop.f32.mrb[0].mxu0
        %1148 = vmatprep.mubr.f32.mxu0 0.0
        %1149 = vmatmul.mubr.f32.gmra.mrb[0].mxu0 %v308
        %v1150 = vpop.f32.mrb[0].mxu0
        %v1151 = vadd.f32 %v1019, %v1150
        %v1152 = vpop.f32.mrb[0].mxu0
        %1153 = vmatprep.mubr.f32.mxu0 0.0
        %1154 = vmatmul.mubr.f32.gmra.mrb[0].mxu0 %v311
        %v1155 = vpop.f32.mrb[0].mxu0
        %v1156 = vadd.f32 %v1019, %v1155
        %v1157 = vpop.f32.mrb[0].mxu0
        %1158 = vmatprep.mubr.f32.mxu0 0.0
        %1159 = vmatmul.mubr.f32.gmra.mrb[0].mxu0 %v314
        %v1160 = vpop.f32.mrb[0].mxu0
        %v1161 = vadd.f32 %v1019, %v1160
        %v1162 = vpop.f32.mrb[0].mxu0
        %1163 = vmatprep.mubr.f32.mxu0 0.0
        %1164 = vmatmul.mubr.f32.gmra.mrb[0].mxu0 %v317
        %v1165 = vpop.f32.mrb[0].mxu0
        %v1166 = vadd.f32 %v1019, %v1165
        %v1167 = vpop.f32.mrb[0].mxu0
        %1168 = vmatprep.mubr.f32.mxu0 0.0
        %1169 = vmatmul.mubr.f32.gmra.mrb[0].mxu0 %v320
        %v1170 = vpop.f32.mrb[0].mxu0
        %v1171 = vadd.f32 %v1019, %v1170
        %v1172 = vpop.f32.mrb[0].mxu0
        %1173 = vmatprep.mubr.f32.mxu0 0.0
        %1174 = vmatmul.mubr.f32.gmra.mrb[0].mxu0 %v323
        %v1175 = vpop.f32.mrb[0].mxu0
        %v1176 = vadd.f32 %v1019, %v1175
        %v1177 = vpop.f32.mrb[0].mxu0
        %1178 = vmatprep.mubr.f32.mxu0 0.0
        %1179 = vmatmul.mubr.f32.gmra.mrb[0].mxu0 %v326
        %v1180 = vpop.f32.mrb[0].mxu0
        %v1181 = vadd.f32 %v1019, %v1180
        %v1182 = vpop.f32.mrb[0].mxu0
        %1183 = vmatprep.mubr.f32.mxu0 0.0
        %1184 = vmatmul.mubr.f32.gmra.mrb[0].mxu0 %v329
        %v1185 = vpop.f32.mrb[0].mxu0
        %v1186 = vadd.f32 %v1019, %v1185
        %v1187 = vpop.f32.mrb[0].mxu0
        %1188 = vmatprep.mubr.f32.mxu0 0.0
        %1189 = vmatmul.mubr.f32.gmra.mrb[0].mxu0 %v332
        %v1190 = vpop.f32.mrb[0].mxu0
        %v1191 = vadd.f32 %v1019, %v1190
        %v1192 = vpop.f32.mrb[0].mxu0
        %1193 = vmatprep.mubr.f32.mxu0 0.0
        %1194 = vmatmul.mubr.f32.gmra.mrb[0].mxu0 %v335
        %v1195 = vpop.f32.mrb[0].mxu0
        %v1196 = vadd.f32 %v1019, %v1195
        %v1197 = vpop.f32.mrb[0].mxu0
        %1198 = vmatprep.mubr.f32.mxu0 0.0
        %1199 = vmatmul.mubr.f32.gmra.mrb[0].mxu0 %v338
        %v1200 = vpop.f32.mrb[0].mxu0
        %v1201 = vadd.f32 %v1019, %v1200
        %v1202 = vpop.f32.mrb[0].mxu0
        %1203 = vmatprep.mubr.f32.mxu0 0.0
        %1204 = vmatmul.mubr.f32.gmra.mrb[0].mxu0 %v341
        %v1205 = vpop.f32.mrb[0].mxu0
        %v1206 = vadd.f32 %v1019, %v1205
        %v1207 = vpop.f32.mrb[0].mxu0
        %1208 = vmatprep.mubr.f32.mxu0 0.0
        %1209 = vmatmul.mubr.f32.gmra.mrb[0].mxu0 %v344
        %v1210 = vpop.f32.mrb[0].mxu0
        %v1211 = vadd.f32 %v1019, %v1210
        %v1212 = vpop.f32.mrb[0].mxu0
        %1213 = vmatprep.mubr.f32.mxu0 0.0
        %1214 = vmatmul.mubr.f32.gmra.mrb[0].mxu0 %v347
        %v1215 = vpop.f32.mrb[0].mxu0
        %v1216 = vadd.f32 %v1019, %v1215
        %v1217 = vpop.f32.mrb[0].mxu0
        %1218 = vmatprep.mubr.f32.mxu0 0.0
        %1219 = vmatmul.mubr.f32.gmra.mrb[0].mxu0 %v350
        %v1220 = vpop.f32.mrb[0].mxu0
        %v1221 = vadd.f32 %v1019, %v1220
        %v1222 = vpop.f32.mrb[0].mxu0
        %1223 = vmatprep.mubr.f32.mxu0 0.0
        %1224 = vmatmul.mubr.f32.gmra.mrb[0].mxu0 %v353
        %v1225 = vpop.f32.mrb[0].mxu0
        %v1226 = vadd.f32 %v1019, %v1225
        %v1227 = vpop.f32.mrb[0].mxu0
        %1228 = vmatprep.mubr.f32.mxu0 0.0
        %1229 = vmatmul.mubr.f32.gmra.mrb[0].mxu0 %v356
        %v1230 = vpop.f32.mrb[0].mxu0
        %v1231 = vadd.f32 %v1019, %v1230
        %v1232 = vpop.f32.mrb[0].mxu0
        %1233 = vmatprep.mubr.f32.mxu0 0.0
        %1234 = vmatmul.mubr.f32.gmra.mrb[0].mxu0 %v359
        %v1235 = vpop.f32.mrb[0].mxu0
        %v1236 = vadd.f32 %v1019, %v1235
        %v1237 = vpop.f32.mrb[0].mxu0
        %1238 = vmatprep.mubr.f32.mxu0 0.0
        %1239 = vmatmul.mubr.f32.gmra.mrb[0].mxu0 %v362
        %v1240 = vpop.f32.mrb[0].mxu0
        %v1241 = vadd.f32 %v1019, %v1240
        %v1242 = vpop.f32.mrb[0].mxu0
        %1243 = vmatprep.mubr.f32.mxu0 0.0
        %1244 = vmatmul.mubr.f32.gmra.mrb[0].mxu0 %v365
        %v1245 = vpop.f32.mrb[0].mxu0
        %v1246 = vadd.f32 %v1019, %v1245
        %v1247 = vpop.f32.mrb[0].mxu0
        %1248 = vdwg.mxu0
        %1249 = vmatprep.subr.mxu0 0.0
        %1250 = vmatpush1.msra.mxu0 %v1091
        %1251 = vmatprep.subr.mxu0 0.0
        %1252 = vmatpush1.msra.mxu0 %v1096
        %1253 = vmatprep.subr.mxu0 0.0
        %1254 = vmatpush1.msra.mxu0 %v1101
        %1255 = vmatprep.subr.mxu0 0.0
        %1256 = vmatpush1.msra.mxu0 %v1106
        %1257 = vmatprep.subr.mxu0 0.0
        %1258 = vmatpush1.msra.mxu0 %v1111
        %1259 = vmatprep.subr.mxu0 0.0
        %1260 = vmatpush1.msra.mxu0 %v1116
        %1261 = vmatprep.subr.mxu0 0.0
        %1262 = vmatpush1.msra.mxu0 %v1121
        %1263 = vmatprep.subr.mxu0 0.0
        %1264 = vmatpush1.msra.mxu0 %v1126
        %1265 = vmatprep.subr.mxu0 0.0
        %1266 = vmatpush1.msra.mxu0 %v1131
        %1267 = vmatprep.subr.mxu0 0.0
        %1268 = vmatpush1.msra.mxu0 %v1136
        %1269 = vmatprep.subr.mxu0 0.0
        %1270 = vmatpush1.msra.mxu0 %v1141
        %1271 = vmatprep.subr.mxu0 0.0
        %1272 = vmatpush1.msra.mxu0 %v1146
        %1273 = vmatprep.subr.mxu0 0.0
        %1274 = vmatpush1.msra.mxu0 %v1151
        %1275 = vmatprep.subr.mxu0 0.0
        %1276 = vmatpush1.msra.mxu0 %v1156
        %1277 = vmatprep.subr.mxu0 0.0
        %1278 = vmatpush1.msra.mxu0 %v1161
        %1279 = vmatprep.subr.mxu0 0.0
        %1280 = vmatpush1.msra.mxu0 %v1166
        %1281 = vmatprep.subr.mxu0 0.0
        %1282 = vmatpush1.msra.mxu0 %v1171
        %1283 = vmatprep.subr.mxu0 0.0
        %1284 = vmatpush1.msra.mxu0 %v1176
        %1285 = vmatprep.subr.mxu0 0.0
        %1286 = vmatpush1.msra.mxu0 %v1181
        %1287 = vmatprep.subr.mxu0 0.0
        %1288 = vmatpush1.msra.mxu0 %v1186
        %1289 = vmatprep.subr.mxu0 0.0
        %1290 = vmatpush1.msra.mxu0 %v1191
        %1291 = vmatprep.subr.mxu0 0.0
        %1292 = vmatpush1.msra.mxu0 %v1196
        %1293 = vmatprep.subr.mxu0 0.0
        %1294 = vmatpush1.msra.mxu0 %v1201
        %1295 = vmatprep.subr.mxu0 0.0
        %1296 = vmatpush1.msra.mxu0 %v1206
        %1297 = vmatprep.subr.mxu0 0.0
        %1298 = vmatpush1.msra.mxu0 %v1211
        %1299 = vmatprep.subr.mxu0 0.0
        %1300 = vmatpush1.msra.mxu0 %v1216
        %1301 = vmatprep.subr.mxu0 0.0
        %1302 = vmatpush1.msra.mxu0 %v1221
        %1303 = vmatprep.subr.mxu0 0.0
        %1304 = vmatpush1.msra.mxu0 %v1226
        %1305 = vmatprep.subr.mxu0 0.0
        %1306 = vmatpush1.msra.mxu0 %v1231
        %1307 = vmatprep.subr.mxu0 0.0
        %1308 = vmatpush1.msra.mxu0 %v1236
        %1309 = vmatprep.subr.mxu0 0.0
        %1310 = vmatpush1.msra.mxu0 %v1241
        %1311 = vmatprep.subr.mxu0 0.0
        %1312 = vmatpush1.msra.mxu0 %v1246
        %1313 = vmatprep.mubr.f32.mxu0 %v792
        %1314 = vmatmul.mubr.f32.gmra.mrb[0].mxu0 %v790
        %v1315 = vpop.f32.mrb[0].mxu0
        %v1316 = vadd.f32 0.0, %v1315
        %v1317 = vpop.f32.mrb[0].mxu0
        %1318 = vmatprep.mubr.f32.mxu0 %v796
        %1319 = vmatmul.mubr.f32.gmra.mrb[0].mxu0 %v794
        %v1320 = vpop.f32.mrb[0].mxu0
        %v1321 = vadd.f32 0.0, %v1320
        %v1322 = vpop.f32.mrb[0].mxu0
        %1323 = vmatprep.mubr.f32.mxu0 %v800
        %1324 = vmatmul.mubr.f32.gmra.mrb[0].mxu0 %v798
        %v1325 = vpop.f32.mrb[0].mxu0
        %v1326 = vadd.f32 0.0, %v1325
        %v1327 = vpop.f32.mrb[0].mxu0
        %1328 = vmatprep.mubr.f32.mxu0 %v804
        %1329 = vmatmul.mubr.f32.gmra.mrb[0].mxu0 %v802
        %v1330 = vpop.f32.mrb[0].mxu0
        %v1331 = vadd.f32 0.0, %v1330
        %v1332 = vpop.f32.mrb[0].mxu0
        %1333 = vmatprep.mubr.f32.mxu0 %v808
        %1334 = vmatmul.mubr.f32.gmra.mrb[0].mxu0 %v806
        %v1335 = vpop.f32.mrb[0].mxu0
        %v1336 = vadd.f32 0.0, %v1335
        %v1337 = vpop.f32.mrb[0].mxu0
        %1338 = vmatprep.mubr.f32.mxu0 %v812
        %1339 = vmatmul.mubr.f32.gmra.mrb[0].mxu0 %v810
        %v1340 = vpop.f32.mrb[0].mxu0
        %v1341 = vadd.f32 0.0, %v1340
        %v1342 = vpop.f32.mrb[0].mxu0
        %1343 = vmatprep.mubr.f32.mxu0 %v816
        %1344 = vmatmul.mubr.f32.gmra.mrb[0].mxu0 %v814
        %v1345 = vpop.f32.mrb[0].mxu0
        %v1346 = vadd.f32 0.0, %v1345
        %v1347 = vpop.f32.mrb[0].mxu0
        %1348 = vmatprep.mubr.f32.mxu0 %v820
        %1349 = vmatmul.mubr.f32.gmra.mrb[0].mxu0 %v818
        %v1350 = vpop.f32.mrb[0].mxu0
        %v1351 = vadd.f32 0.0, %v1350
        %v1352 = vpop.f32.mrb[0].mxu0
        %1353 = vmatprep.mubr.f32.mxu0 %v824
        %1354 = vmatmul.mubr.f32.gmra.mrb[0].mxu0 %v822
        %v1355 = vpop.f32.mrb[0].mxu0
        %v1356 = vadd.f32 0.0, %v1355
        %v1357 = vpop.f32.mrb[0].mxu0
        %1358 = vmatprep.mubr.f32.mxu0 %v828
        %1359 = vmatmul.mubr.f32.gmra.mrb[0].mxu0 %v826
        %v1360 = vpop.f32.mrb[0].mxu0
        %v1361 = vadd.f32 0.0, %v1360
        %v1362 = vpop.f32.mrb[0].mxu0
        %1363 = vmatprep.mubr.f32.mxu0 %v832
        %1364 = vmatmul.mubr.f32.gmra.mrb[0].mxu0 %v830
        %v1365 = vpop.f32.mrb[0].mxu0
        %v1366 = vadd.f32 0.0, %v1365
        %v1367 = vpop.f32.mrb[0].mxu0
        %1368 = vmatprep.mubr.f32.mxu0 %v836
        %1369 = vmatmul.mubr.f32.gmra.mrb[0].mxu0 %v834
        %v1370 = vpop.f32.mrb[0].mxu0
        %v1371 = vadd.f32 0.0, %v1370
        %v1372 = vpop.f32.mrb[0].mxu0
        %1373 = vmatprep.mubr.f32.mxu0 %v840
        %1374 = vmatmul.mubr.f32.gmra.mrb[0].mxu0 %v838
        %v1375 = vpop.f32.mrb[0].mxu0
        %v1376 = vadd.f32 0.0, %v1375
        %v1377 = vpop.f32.mrb[0].mxu0
        %1378 = vmatprep.mubr.f32.mxu0 %v844
        %1379 = vmatmul.mubr.f32.gmra.mrb[0].mxu0 %v842
        %v1380 = vpop.f32.mrb[0].mxu0
        %v1381 = vadd.f32 0.0, %v1380
        %v1382 = vpop.f32.mrb[0].mxu0
        %1383 = vmatprep.mubr.f32.mxu0 %v848
        %1384 = vmatmul.mubr.f32.gmra.mrb[0].mxu0 %v846
        %v1385 = vpop.f32.mrb[0].mxu0
        %v1386 = vadd.f32 0.0, %v1385
        %v1387 = vpop.f32.mrb[0].mxu0
        %1388 = vmatprep.mubr.f32.mxu0 %v852
        %1389 = vmatmul.mubr.f32.gmra.mrb[0].mxu0 %v850
        %v1390 = vpop.f32.mrb[0].mxu0
        %v1391 = vadd.f32 0.0, %v1390
        %v1392 = vpop.f32.mrb[0].mxu0
        %1393 = vmatprep.mubr.f32.mxu0 %v856
        %1394 = vmatmul.mubr.f32.gmra.mrb[0].mxu0 %v854
        %v1395 = vpop.f32.mrb[0].mxu0
        %v1396 = vadd.f32 0.0, %v1395
        %v1397 = vpop.f32.mrb[0].mxu0
        %1398 = vmatprep.mubr.f32.mxu0 %v860
        %1399 = vmatmul.mubr.f32.gmra.mrb[0].mxu0 %v858
        %v1400 = vpop.f32.mrb[0].mxu0
        %v1401 = vadd.f32 0.0, %v1400
        %v1402 = vpop.f32.mrb[0].mxu0
        %1403 = vmatprep.mubr.f32.mxu0 %v864
        %1404 = vmatmul.mubr.f32.gmra.mrb[0].mxu0 %v862
        %v1405 = vpop.f32.mrb[0].mxu0
        %v1406 = vadd.f32 0.0, %v1405
        %v1407 = vpop.f32.mrb[0].mxu0
        %1408 = vmatprep.mubr.f32.mxu0 %v868
        %1409 = vmatmul.mubr.f32.gmra.mrb[0].mxu0 %v866
        %v1410 = vpop.f32.mrb[0].mxu0
        %v1411 = vadd.f32 0.0, %v1410
        %v1412 = vpop.f32.mrb[0].mxu0
        %1413 = vmatprep.mubr.f32.mxu0 %v872
        %1414 = vmatmul.mubr.f32.gmra.mrb[0].mxu0 %v870
        %v1415 = vpop.f32.mrb[0].mxu0
        %v1416 = vadd.f32 0.0, %v1415
        %v1417 = vpop.f32.mrb[0].mxu0
        %1418 = vmatprep.mubr.f32.mxu0 %v876
        %1419 = vmatmul.mubr.f32.gmra.mrb[0].mxu0 %v874
        %v1420 = vpop.f32.mrb[0].mxu0
        %v1421 = vadd.f32 0.0, %v1420
        %v1422 = vpop.f32.mrb[0].mxu0
        %1423 = vmatprep.mubr.f32.mxu0 %v880
        %1424 = vmatmul.mubr.f32.gmra.mrb[0].mxu0 %v878
        %v1425 = vpop.f32.mrb[0].mxu0
        %v1426 = vadd.f32 0.0, %v1425
        %v1427 = vpop.f32.mrb[0].mxu0
        %1428 = vmatprep.mubr.f32.mxu0 %v884
        %1429 = vmatmul.mubr.f32.gmra.mrb[0].mxu0 %v882
        %v1430 = vpop.f32.mrb[0].mxu0
        %v1431 = vadd.f32 0.0, %v1430
        %v1432 = vpop.f32.mrb[0].mxu0
        %1433 = vmatprep.mubr.f32.mxu0 %v888
        %1434 = vmatmul.mubr.f32.gmra.mrb[0].mxu0 %v886
        %v1435 = vpop.f32.mrb[0].mxu0
        %v1436 = vadd.f32 0.0, %v1435
        %v1437 = vpop.f32.mrb[0].mxu0
        %1438 = vmatprep.mubr.f32.mxu0 %v892
        %1439 = vmatmul.mubr.f32.gmra.mrb[0].mxu0 %v890
        %v1440 = vpop.f32.mrb[0].mxu0
        %v1441 = vadd.f32 0.0, %v1440
        %v1442 = vpop.f32.mrb[0].mxu0
        %1443 = vmatprep.mubr.f32.mxu0 %v896
        %1444 = vmatmul.mubr.f32.gmra.mrb[0].mxu0 %v894
        %v1445 = vpop.f32.mrb[0].mxu0
        %v1446 = vadd.f32 0.0, %v1445
        %v1447 = vpop.f32.mrb[0].mxu0
        %1448 = vmatprep.mubr.f32.mxu0 %v900
        %1449 = vmatmul.mubr.f32.gmra.mrb[0].mxu0 %v898
        %v1450 = vpop.f32.mrb[0].mxu0
        %v1451 = vadd.f32 0.0, %v1450
        %v1452 = vpop.f32.mrb[0].mxu0
        %1453 = vmatprep.mubr.f32.mxu0 %v904
        %1454 = vmatmul.mubr.f32.gmra.mrb[0].mxu0 %v902
        %v1455 = vpop.f32.mrb[0].mxu0
        %v1456 = vadd.f32 0.0, %v1455
        %v1457 = vpop.f32.mrb[0].mxu0
        %1458 = vmatprep.mubr.f32.mxu0 %v908
        %1459 = vmatmul.mubr.f32.gmra.mrb[0].mxu0 %v906
        %v1460 = vpop.f32.mrb[0].mxu0
        %v1461 = vadd.f32 0.0, %v1460
        %v1462 = vpop.f32.mrb[0].mxu0
        %1463 = vmatprep.mubr.f32.mxu0 %v912
        %1464 = vmatmul.mubr.f32.gmra.mrb[0].mxu0 %v910
        %v1465 = vpop.f32.mrb[0].mxu0
        %v1466 = vadd.f32 0.0, %v1465
        %v1467 = vpop.f32.mrb[0].mxu0
        %1468 = vmatprep.mubr.f32.mxu0 %v916
        %1469 = vmatmul.mubr.f32.gmra.mrb[0].mxu0 %v914
        %v1470 = vpop.f32.mrb[0].mxu0
        %v1471 = vadd.f32 0.0, %v1470
        %v1472 = vpop.f32.mrb[0].mxu0
        %1473 = vdwg.mxu0
        %v1474 = vrcp.pop %v919
        %v1475 = vrcp.pop %v922
        %v1476 = vrcp.pop %v925
        %v1477 = vrcp.pop %v928
        %v1478 = vrcp.pop %v931
        %v1479 = vrcp.pop %v934
        %v1480 = vrcp.pop %v937
        %v1481 = vrcp.pop %v940
        %v1482 = vrcp.pop %v943
        %v1483 = vrcp.pop %v946
        %v1484 = vrcp.pop %v949
        %v1485 = vrcp.pop %v952
        %v1486 = vrcp.pop %v955
        %v1487 = vrcp.pop %v958
        %v1488 = vrcp.pop %v961
        %v1489 = vrcp.pop %v964
        %v1490 = vrcp.pop %v967
        %v1491 = vrcp.pop %v970
        %v1492 = vrcp.pop %v973
        %v1493 = vrcp.pop %v976
        %v1494 = vrcp.pop %v979
        %v1495 = vrcp.pop %v982
        %v1496 = vrcp.pop %v985
        %v1497 = vrcp.pop %v988
        %v1498 = vrcp.pop %v991
        %v1499 = vrcp.pop %v994
        %v1500 = vrcp.pop %v997
        %v1501 = vrcp.pop %v1000
        %v1502 = vrcp.pop %v1003
        %v1503 = vrcp.pop %v1006
        %v1504 = vrcp.pop %v1009
        %v1505 = vrcp.pop %v1012
        %v1506 = vmul.f32 %v1316, %v1474
        %v1507 = vmul.f32 %v1321, %v1475
        %v1508 = vmul.f32 %v1326, %v1476
        %v1509 = vmul.f32 %v1331, %v1477
        %v1510 = vmul.f32 %v1336, %v1478
        %v1511 = vmul.f32 %v1341, %v1479
        %v1512 = vmul.f32 %v1346, %v1480
        %v1513 = vmul.f32 %v1351, %v1481
        %v1514 = vmul.f32 %v1356, %v1482
        %v1515 = vmul.f32 %v1361, %v1483
        %v1516 = vmul.f32 %v1366, %v1484
        %v1517 = vmul.f32 %v1371, %v1485
        %v1518 = vmul.f32 %v1376, %v1486
        %v1519 = vmul.f32 %v1381, %v1487
        %v1520 = vmul.f32 %v1386, %v1488
        %v1521 = vmul.f32 %v1391, %v1489
        %v1522 = vmul.f32 %v1396, %v1490
        %v1523 = vmul.f32 %v1401, %v1491
        %v1524 = vmul.f32 %v1406, %v1492
        %v1525 = vmul.f32 %v1411, %v1493
        %v1526 = vmul.f32 %v1416, %v1494
        %v1527 = vmul.f32 %v1421, %v1495
        %v1528 = vmul.f32 %v1426, %v1496
        %v1529 = vmul.f32 %v1431, %v1497
        %v1530 = vmul.f32 %v1436, %v1498
        %v1531 = vmul.f32 %v1441, %v1499
        %v1532 = vmul.f32 %v1446, %v1500
        %v1533 = vmul.f32 %v1451, %v1501
        %v1534 = vmul.f32 %v1456, %v1502
        %v1535 = vmul.f32 %v1461, %v1503
        %v1536 = vmul.f32 %v1466, %v1504
        %v1537 = vmul.f32 %v1471, %v1505
        %1570 = vrot.lane.b32.xlu0 %v1506, 127
        %v1571 = vpop.permute.xlu0 %1570
        %1572 = vrot.lane.b32.xlu0 %v1507, 127
        %v1573 = vpop.permute.xlu0 %1572
        %1574 = vrot.lane.b32.xlu0 %v1508, 127
        %v1575 = vpop.permute.xlu0 %1574
        %1576 = vrot.lane.b32.xlu0 %v1509, 127
        %v1577 = vpop.permute.xlu0 %1576
        %1578 = vrot.lane.b32.xlu0 %v1510, 127
        %v1579 = vpop.permute.xlu0 %1578
        %1580 = vrot.lane.b32.xlu0 %v1511, 127
        %v1581 = vpop.permute.xlu0 %1580
        %1582 = vrot.lane.b32.xlu0 %v1512, 127
        %v1583 = vpop.permute.xlu0 %1582
        %1584 = vrot.lane.b32.xlu0 %v1513, 127
        %v1585 = vpop.permute.xlu0 %1584
        %1586 = vrot.lane.b32.xlu0 %v1514, 127
        %v1587 = vpop.permute.xlu0 %1586
        %1588 = vrot.lane.b32.xlu0 %v1515, 127
        %v1589 = vpop.permute.xlu0 %1588
        %1590 = vrot.lane.b32.xlu0 %v1516, 127
        %v1591 = vpop.permute.xlu0 %1590
        %1592 = vrot.lane.b32.xlu0 %v1517, 127
        %v1593 = vpop.permute.xlu0 %1592
        %1594 = vrot.lane.b32.xlu0 %v1518, 127
        %v1595 = vpop.permute.xlu0 %1594
        %1596 = vrot.lane.b32.xlu0 %v1519, 127
        %v1597 = vpop.permute.xlu0 %1596
        %1598 = vrot.lane.b32.xlu0 %v1520, 127
        %v1599 = vpop.permute.xlu0 %1598
        %1600 = vrot.lane.b32.xlu0 %v1521, 127
        %v1601 = vpop.permute.xlu0 %1600
        %1602 = vrot.lane.b32.xlu0 %v1522, 127
        %v1603 = vpop.permute.xlu0 %1602
        %1604 = vrot.lane.b32.xlu0 %v1523, 127
        %v1605 = vpop.permute.xlu0 %1604
        %1606 = vrot.lane.b32.xlu0 %v1524, 127
        %v1607 = vpop.permute.xlu0 %1606
        %1608 = vrot.lane.b32.xlu0 %v1525, 127
        %v1609 = vpop.permute.xlu0 %1608
        %1610 = vrot.lane.b32.xlu0 %v1526, 127
        %v1611 = vpop.permute.xlu0 %1610
        %1612 = vrot.lane.b32.xlu0 %v1527, 127
        %v1613 = vpop.permute.xlu0 %1612
        %1614 = vrot.lane.b32.xlu0 %v1528, 127
        %v1615 = vpop.permute.xlu0 %1614
        %1616 = vrot.lane.b32.xlu0 %v1529, 127
        %v1617 = vpop.permute.xlu0 %1616
        %1618 = vrot.lane.b32.xlu0 %v1530, 127
        %v1619 = vpop.permute.xlu0 %1618
        %1620 = vrot.lane.b32.xlu0 %v1531, 127
        %v1621 = vpop.permute.xlu0 %1620
        %1622 = vrot.lane.b32.xlu0 %v1532, 127
        %v1623 = vpop.permute.xlu0 %1622
        %1624 = vrot.lane.b32.xlu0 %v1533, 127
        %v1625 = vpop.permute.xlu0 %1624
        %1626 = vrot.lane.b32.xlu0 %v1534, 127
        %v1627 = vpop.permute.xlu0 %1626
        %1628 = vrot.lane.b32.xlu0 %v1535, 127
        %v1629 = vpop.permute.xlu0 %1628
        %1630 = vrot.lane.b32.xlu0 %v1536, 127
        %v1631 = vpop.permute.xlu0 %1630
        %1632 = vrot.lane.b32.xlu0 %v1537, 127
        %v1633 = vpop.permute.xlu0 %1632
        %v1666 = vmax.f32 %v1506, %v1571
        %v1667 = vmax.f32 %v1507, %v1573
        %v1668 = vmax.f32 %v1508, %v1575
        %v1669 = vmax.f32 %v1509, %v1577
        %v1670 = vmax.f32 %v1510, %v1579
        %v1671 = vmax.f32 %v1511, %v1581
        %v1672 = vmax.f32 %v1512, %v1583
        %v1673 = vmax.f32 %v1513, %v1585
        %v1674 = vmax.f32 %v1514, %v1587
        %v1675 = vmax.f32 %v1515, %v1589
        %v1676 = vmax.f32 %v1516, %v1591
        %v1677 = vmax.f32 %v1517, %v1593
        %v1678 = vmax.f32 %v1518, %v1595
        %v1679 = vmax.f32 %v1519, %v1597
        %v1680 = vmax.f32 %v1520, %v1599
        %v1681 = vmax.f32 %v1521, %v1601
        %v1682 = vmax.f32 %v1522, %v1603
        %v1683 = vmax.f32 %v1523, %v1605
        %v1684 = vmax.f32 %v1524, %v1607
        %v1685 = vmax.f32 %v1525, %v1609
        %v1686 = vmax.f32 %v1526, %v1611
        %v1687 = vmax.f32 %v1527, %v1613
        %v1688 = vmax.f32 %v1528, %v1615
        %v1689 = vmax.f32 %v1529, %v1617
        %v1690 = vmax.f32 %v1530, %v1619
        %v1691 = vmax.f32 %v1531, %v1621
        %v1692 = vmax.f32 %v1532, %v1623
        %v1693 = vmax.f32 %v1533, %v1625
        %v1694 = vmax.f32 %v1534, %v1627
        %v1695 = vmax.f32 %v1535, %v1629
        %v1696 = vmax.f32 %v1536, %v1631
        %v1697 = vmax.f32 %v1537, %v1633
        %1730 = vrot.lane.b32.xlu0 %v1666, 127
        %v1731 = vpop.permute.xlu0 %1730
        %1732 = vrot.lane.b32.xlu0 %v1667, 127
        %v1733 = vpop.permute.xlu0 %1732
        %1734 = vrot.lane.b32.xlu0 %v1668, 127
        %v1735 = vpop.permute.xlu0 %1734
        %1736 = vrot.lane.b32.xlu0 %v1669, 127
        %v1737 = vpop.permute.xlu0 %1736
        %1738 = vrot.lane.b32.xlu0 %v1670, 127
        %v1739 = vpop.permute.xlu0 %1738
        %1740 = vrot.lane.b32.xlu0 %v1671, 127
        %v1741 = vpop.permute.xlu0 %1740
        %1742 = vrot.lane.b32.xlu0 %v1672, 127
        %v1743 = vpop.permute.xlu0 %1742
        %1744 = vrot.lane.b32.xlu0 %v1673, 127
        %v1745 = vpop.permute.xlu0 %1744
        %1746 = vrot.lane.b32.xlu0 %v1674, 127
        %v1747 = vpop.permute.xlu0 %1746
        %1748 = vrot.lane.b32.xlu0 %v1675, 127
        %v1749 = vpop.permute.xlu0 %1748
        %1750 = vrot.lane.b32.xlu0 %v1676, 127
        %v1751 = vpop.permute.xlu0 %1750
        %1752 = vrot.lane.b32.xlu0 %v1677, 127
        %v1753 = vpop.permute.xlu0 %1752
        %1754 = vrot.lane.b32.xlu0 %v1678, 127
        %v1755 = vpop.permute.xlu0 %1754
        %1756 = vrot.lane.b32.xlu0 %v1679, 127
        %v1757 = vpop.permute.xlu0 %1756
        %1758 = vrot.lane.b32.xlu0 %v1680, 127
        %v1759 = vpop.permute.xlu0 %1758
        %1760 = vrot.lane.b32.xlu0 %v1681, 127
        %v1761 = vpop.permute.xlu0 %1760
        %1762 = vrot.lane.b32.xlu0 %v1682, 127
        %v1763 = vpop.permute.xlu0 %1762
        %1764 = vrot.lane.b32.xlu0 %v1683, 127
        %v1765 = vpop.permute.xlu0 %1764
        %1766 = vrot.lane.b32.xlu0 %v1684, 127
        %v1767 = vpop.permute.xlu0 %1766
        %1768 = vrot.lane.b32.xlu0 %v1685, 127
        %v1769 = vpop.permute.xlu0 %1768
        %1770 = vrot.lane.b32.xlu0 %v1686, 127
        %v1771 = vpop.permute.xlu0 %1770
        %1772 = vrot.lane.b32.xlu0 %v1687, 127
        %v1773 = vpop.permute.xlu0 %1772
        %1774 = vrot.lane.b32.xlu0 %v1688, 127
        %v1775 = vpop.permute.xlu0 %1774
        %1776 = vrot.lane.b32.xlu0 %v1689, 127
        %v1777 = vpop.permute.xlu0 %1776
        %1778 = vrot.lane.b32.xlu0 %v1690, 127
        %v1779 = vpop.permute.xlu0 %1778
        %1780 = vrot.lane.b32.xlu0 %v1691, 127
        %v1781 = vpop.permute.xlu0 %1780
        %1782 = vrot.lane.b32.xlu0 %v1692, 127
        %v1783 = vpop.permute.xlu0 %1782
        %1784 = vrot.lane.b32.xlu0 %v1693, 127
        %v1785 = vpop.permute.xlu0 %1784
        %1786 = vrot.lane.b32.xlu0 %v1694, 127
        %v1787 = vpop.permute.xlu0 %1786
        %1788 = vrot.lane.b32.xlu0 %v1695, 127
        %v1789 = vpop.permute.xlu0 %1788
        %1790 = vrot.lane.b32.xlu0 %v1696, 127
        %v1791 = vpop.permute.xlu0 %1790
        %1792 = vrot.lane.b32.xlu0 %v1697, 127
        %v1793 = vpop.permute.xlu0 %1792
        %vm1826 = vcmask 7168
        %v1827 = vsel %vm1826, %v1666, %v1731
        %v1828 = vsel %vm1826, %v1667, %v1733
        %v1829 = vsel %vm1826, %v1668, %v1735
        %v1830 = vsel %vm1826, %v1669, %v1737
        %v1831 = vsel %vm1826, %v1670, %v1739
        %v1832 = vsel %vm1826, %v1671, %v1741
        %v1833 = vsel %vm1826, %v1672, %v1743
        %v1834 = vsel %vm1826, %v1673, %v1745
        %v1835 = vsel %vm1826, %v1674, %v1747
        %v1836 = vsel %vm1826, %v1675, %v1749
        %v1837 = vsel %vm1826, %v1676, %v1751
        %v1838 = vsel %vm1826, %v1677, %v1753
        %v1839 = vsel %vm1826, %v1678, %v1755
        %v1840 = vsel %vm1826, %v1679, %v1757
        %v1841 = vsel %vm1826, %v1680, %v1759
        %v1842 = vsel %vm1826, %v1681, %v1761
        %v1843 = vsel %vm1826, %v1682, %v1763
        %v1844 = vsel %vm1826, %v1683, %v1765
        %v1845 = vsel %vm1826, %v1684, %v1767
        %v1846 = vsel %vm1826, %v1685, %v1769
        %v1847 = vsel %vm1826, %v1686, %v1771
        %v1848 = vsel %vm1826, %v1687, %v1773
        %v1849 = vsel %vm1826, %v1688, %v1775
        %v1850 = vsel %vm1826, %v1689, %v1777
        %v1851 = vsel %vm1826, %v1690, %v1779
        %v1852 = vsel %vm1826, %v1691, %v1781
        %v1853 = vsel %vm1826, %v1692, %v1783
        %v1854 = vsel %vm1826, %v1693, %v1785
        %v1855 = vsel %vm1826, %v1694, %v1787
        %v1856 = vsel %vm1826, %v1695, %v1789
        %v1857 = vsel %vm1826, %v1696, %v1791
        %v1858 = vsel %vm1826, %v1697, %v1793
        %v1891 = vrot.slane %v1827, 4
        %v1892 = vrot.slane %v1828, 4
        %v1893 = vrot.slane %v1829, 4
        %v1894 = vrot.slane %v1830, 4
        %v1895 = vrot.slane %v1831, 4
        %v1896 = vrot.slane %v1832, 4
        %v1897 = vrot.slane %v1833, 4
        %v1898 = vrot.slane %v1834, 4
        %v1899 = vrot.slane %v1835, 4
        %v1900 = vrot.slane %v1836, 4
        %v1901 = vrot.slane %v1837, 4
        %v1902 = vrot.slane %v1838, 4
        %v1903 = vrot.slane %v1839, 4
        %v1904 = vrot.slane %v1840, 4
        %v1905 = vrot.slane %v1841, 4
        %v1906 = vrot.slane %v1842, 4
        %v1907 = vrot.slane %v1843, 4
        %v1908 = vrot.slane %v1844, 4
        %v1909 = vrot.slane %v1845, 4
        %v1910 = vrot.slane %v1846, 4
        %v1911 = vrot.slane %v1847, 4
        %v1912 = vrot.slane %v1848, 4
        %v1913 = vrot.slane %v1849, 4
        %v1914 = vrot.slane %v1850, 4
        %v1915 = vrot.slane %v1851, 4
        %v1916 = vrot.slane %v1852, 4
        %v1917 = vrot.slane %v1853, 4
        %v1918 = vrot.slane %v1854, 4
        %v1919 = vrot.slane %v1855, 4
        %v1920 = vrot.slane %v1856, 4
        %v1921 = vrot.slane %v1857, 4
        %v1922 = vrot.slane %v1858, 4
        %v1955 = vmax.f32 %v1827, %v1891
        %v1956 = vmax.f32 %v1828, %v1892
        %v1957 = vmax.f32 %v1829, %v1893
        %v1958 = vmax.f32 %v1830, %v1894
        %v1959 = vmax.f32 %v1831, %v1895
        %v1960 = vmax.f32 %v1832, %v1896
        %v1961 = vmax.f32 %v1833, %v1897
        %v1962 = vmax.f32 %v1834, %v1898
        %v1963 = vmax.f32 %v1835, %v1899
        %v1964 = vmax.f32 %v1836, %v1900
        %v1965 = vmax.f32 %v1837, %v1901
        %v1966 = vmax.f32 %v1838, %v1902
        %v1967 = vmax.f32 %v1839, %v1903
        %v1968 = vmax.f32 %v1840, %v1904
        %v1969 = vmax.f32 %v1841, %v1905
        %v1970 = vmax.f32 %v1842, %v1906
        %v1971 = vmax.f32 %v1843, %v1907
        %v1972 = vmax.f32 %v1844, %v1908
        %v1973 = vmax.f32 %v1845, %v1909
        %v1974 = vmax.f32 %v1846, %v1910
        %v1975 = vmax.f32 %v1847, %v1911
        %v1976 = vmax.f32 %v1848, %v1912
        %v1977 = vmax.f32 %v1849, %v1913
        %v1978 = vmax.f32 %v1850, %v1914
        %v1979 = vmax.f32 %v1851, %v1915
        %v1980 = vmax.f32 %v1852, %v1916
        %v1981 = vmax.f32 %v1853, %v1917
        %v1982 = vmax.f32 %v1854, %v1918
        %v1983 = vmax.f32 %v1855, %v1919
        %v1984 = vmax.f32 %v1856, %v1920
        %v1985 = vmax.f32 %v1857, %v1921
        %v1986 = vmax.f32 %v1858, %v1922
        %vm1987 = vcmask 11264
        %1988 = vst.msk [vmem:[%s201] sm:$0xf] %vm1987, %v1955
        %1989 = vst.msk [vmem:[%s201 + $0x4] sm:$0xf] %vm1987, %v1956
        %1990 = vst.msk [vmem:[%s201 + $0x8] sm:$0xf] %vm1987, %v1957
        %1991 = vst.msk [vmem:[%s201 + $0xc] sm:$0xf] %vm1987, %v1958
        %1992 = vst.msk [vmem:[%s201 + $0x10] sm:$0xf] %vm1987, %v1959
        %1993 = vst.msk [vmem:[%s201 + $0x14] sm:$0xf] %vm1987, %v1960
        %1994 = vst.msk [vmem:[%s201 + $0x18] sm:$0xf] %vm1987, %v1961
        %1995 = vst.msk [vmem:[%s201 + $0x1c] sm:$0xf] %vm1987, %v1962
        %1996 = vst.msk [vmem:[%s201 + $0x20] sm:$0xf] %vm1987, %v1963
        %1997 = vst.msk [vmem:[%s201 + $0x24] sm:$0xf] %vm1987, %v1964
        %1998 = vst.msk [vmem:[%s201 + $0x28] sm:$0xf] %vm1987, %v1965
        %1999 = vst.msk [vmem:[%s201 + $0x2c] sm:$0xf] %vm1987, %v1966
        %2000 = vst.msk [vmem:[%s201 + $0x30] sm:$0xf] %vm1987, %v1967
        %2001 = vst.msk [vmem:[%s201 + $0x34] sm:$0xf] %vm1987, %v1968
        %2002 = vst.msk [vmem:[%s201 + $0x38] sm:$0xf] %vm1987, %v1969
        %2003 = vst.msk [vmem:[%s201 + $0x3c] sm:$0xf] %vm1987, %v1970
        %2004 = vst.msk [vmem:[%s201 + $0x40] sm:$0xf] %vm1987, %v1971
        %2005 = vst.msk [vmem:[%s201 + $0x44] sm:$0xf] %vm1987, %v1972
        %2006 = vst.msk [vmem:[%s201 + $0x48] sm:$0xf] %vm1987, %v1973
        %2007 = vst.msk [vmem:[%s201 + $0x4c] sm:$0xf] %vm1987, %v1974
        %2008 = vst.msk [vmem:[%s201 + $0x50] sm:$0xf] %vm1987, %v1975
        %2009 = vst.msk [vmem:[%s201 + $0x54] sm:$0xf] %vm1987, %v1976
        %2010 = vst.msk [vmem:[%s201 + $0x58] sm:$0xf] %vm1987, %v1977
        %2011 = vst.msk [vmem:[%s201 + $0x5c] sm:$0xf] %vm1987, %v1978
        %2012 = vst.msk [vmem:[%s201 + $0x60] sm:$0xf] %vm1987, %v1979
        %2013 = vst.msk [vmem:[%s201 + $0x64] sm:$0xf] %vm1987, %v1980
        %2014 = vst.msk [vmem:[%s201 + $0x68] sm:$0xf] %vm1987, %v1981
        %2015 = vst.msk [vmem:[%s201 + $0x6c] sm:$0xf] %vm1987, %v1982
        %2016 = vst.msk [vmem:[%s201 + $0x70] sm:$0xf] %vm1987, %v1983
        %2017 = vst.msk [vmem:[%s201 + $0x74] sm:$0xf] %vm1987, %v1984
        %2018 = vst.msk [vmem:[%s201 + $0x78] sm:$0xf] %vm1987, %v1985
        %2019 = vst.msk [vmem:[%s201 + $0x7c] sm:$0xf] %vm1987, %v1986
        %p2020 = scmp.lt.s32.totalorder %s18, 1
        %s2021 = scalar_select %p2020, %s18, 1
        %s2022 = smul.addr %s2021, 32
        %s2023 = smul.addr %s2022, 4
        %s2024 = scalar_lea.vmem %s3, %s2023
        // Predicated region
        $region41: #{tpu_custom_call.1} parent=31 // pred_check
          %p2025 = pneg %p104
        $region42: #{tpu_custom_call.1} parent=31 // pred_check_branch
          %2027 = sbr.rel (%p2025) target = $region44
        $region43: #{tpu_custom_call.1} parent=31 // pred_region
          _
        $region44: #{tpu_custom_call.1} parent=31 // pred_fallthru
          _
      $region32: #{tpu_custom_call.1} parent=5 // pred_fallthru
        _
      %p2028 = scmp.le.s32.totalorder 2, %s13
      // Predicated region
      $region45: #{tpu_custom_call.1} parent=5 // pred_check
        %p2029 = pneg %p2028
      $region46: #{tpu_custom_call.1} parent=5 // pred_check_branch
        %2031 = sbr.rel (%p2029) target = $region48
      $region47: #{tpu_custom_call.1} parent=5 // pred_region
        %s2032 = ssub.s32 %s13, 2
        // Predicated region
        $region49: #{tpu_custom_call.1} parent=47 // pred_check
          %p2033 = pneg %p110
        $region50: #{tpu_custom_call.1} parent=47 // pred_check_branch
          %2035 = sbr.rel (%p2033) target = $region52
        $region51: #{tpu_custom_call.1} parent=47 // pred_region
          %p2036 = scmp.lt.s32.totalorder %s19, 1
          %s2037 = scalar_select %p2036, %s19, 1
          %s2038 = smul.addr %s2037, 32
          %s2039 = smul.addr %s2038, 4
          %s2040 = scalar_lea.vmem %s3, %s2039
        $region52: #{tpu_custom_call.1} parent=47 // pred_fallthru
          _
      $region48: #{tpu_custom_call.1} parent=5 // pred_fallthru
        _
    $region6: #{tpu_custom_call.1} parent=1 // loop_footer
      %s17 = sadd.s32 1, %s13
    $region7: #{tpu_custom_call.1} parent=1 // loop_footer_branch
      %12 = sbr.rel target = $region3
    $region8: #{tpu_custom_call.1} parent=1 // loop_exit
      _
    %2041 = vsyncpa [#allocation3], 1
    %s2042 = scalar_lea.sflag [#allocation3], 1
    %2043 = vsyncpa %s2042, 1
    %2044 = vsyncpa [#allocation5], 1

</llo_original>
